<compile_context>
chip_gen: v7x
topology: tpu7x:2x2x1
jax: 0.10.0
libtpu: 0.0.40
codegen_flags: <defaults>
</compile_context>

<pallas_src>
import functools

import jax
import jax.numpy as jnp
from jax.experimental import pallas as pl
from jax.experimental.pallas import tpu as pltpu


# ------------------- fused embedding + LSTM + gather + head kernel -------------------
def fused_lstm_head_kernel(sen_ref, pred_ref, lens_ref,            # SMEM scalar prefetch
                           emb_ref, wih_ref, whh_ref, b_ref, wout_ref, bout_ref,
                           out_ref, *,
                           batch, seq_len, hidden_dim, vocab_size, n_sel):
    B, T, H, V = batch, seq_len, hidden_dim, vocab_size

    # ---- embedding gather as a one-hot matmul, time-major rows r = t*B + b ----------
    iota_v = jax.lax.broadcasted_iota(jnp.int32, (1, V), 1)
    rows = []
    for t in range(T):
        for b in range(B):
            tok = sen_ref[b * T + t]                               # SMEM scalar
            rows.append(jnp.where(iota_v == tok, 1.0, 0.0))        # (1, V) f32
    onehot = jnp.concatenate(rows, axis=0).astype(jnp.bfloat16)    # (T*B, V)

    x = jnp.dot(onehot, emb_ref[...].astype(jnp.bfloat16),
                preferred_element_type=jnp.float32)                # (T*B, E)

    # Hoisted input projection: one MXU call covering every timestep.
    gx = jnp.dot(x.astype(jnp.bfloat16), wih_ref[...].astype(jnp.bfloat16),
                 preferred_element_type=jnp.float32) + b_ref[...]  # (T*B, 4H) f32

    whh_bf = whh_ref[...].astype(jnp.bfloat16)                     # held in vregs/VMEM

    # Gather indices per batch row: [pred_arg0, pred_arg1, last valid position].
    idx = [[pred_ref[b * (n_sel - 1) + k] for k in range(n_sel - 1)] + [lens_ref[b] - 1]
           for b in range(B)]

    h = jnp.zeros((B, H), jnp.float32)
    c = jnp.zeros((B, H), jnp.float32)
    sel = [[jnp.zeros((1, H), jnp.float32) for _ in range(n_sel)] for _ in range(B)]

    # Fully unrolled recurrence (T small & static). Serial critical path per step is a
    # single bf16 (B,H)x(H,4H) MXU pass + full-width gate elementwise math.
    for t in range(T):
        gates = gx[t * B:(t + 1) * B, :] + jnp.dot(
            h.astype(jnp.bfloat16), whh_bf, preferred_element_type=jnp.float32)
        sg = jax.nn.sigmoid(gates)          # full (B,4H) width: 1 EUP push for i,f,o
        th = jnp.tanh(gates)                # full (B,4H) width: 1 EUP push for g
        i_g = sg[:, 0:H]
        f_g = sg[:, H:2 * H]
        g_g = th[:, 2 * H:3 * H]
        o_g = sg[:, 3 * H:4 * H]
        c = f_g * c + i_g * g_g
        h = o_g * jnp.tanh(c)
        # Gather-by-select: keep the requested rows resident in vregs (no VMEM history).
        for b in range(B):
            h_row = h[b:b + 1, :]
            for k in range(n_sel):
                sel[b][k] = jnp.where(idx[b][k] == t, h_row, sel[b][k])

    # Linear head: selected(B, 3H) @ W_out(3H, 2) + b, as a sum over the H-blocks
    # (avoids building a lane-concatenated (B, 3H) value).
    logits = bout_ref[...]                                         # (1, 2) -> broadcast
    for k in range(n_sel):
        blk = jnp.concatenate([sel[b][k] for b in range(B)], axis=0)      # (B, H)
        logits = logits + jnp.dot(blk, wout_ref[k * H:(k + 1) * H, :],
                                  preferred_element_type=jnp.float32)
    out_ref[...] = logits


def lstm_model_forward(params, pred_args, sentences, sentence_lens):
    B, T = sentences.shape
    V, E = params["embedding"].shape
    H4 = params["w_ih"].shape[1]
    H = H4 // 4
    n_sel = pred_args.shape[1] + 1          # 2 pred positions + last valid -> 3

    # Flat 1-D int32 scalar-prefetch arrays (bitcast reshapes; avoid 2-D SMEM padding).
    sen_flat = sentences.reshape(-1).astype(jnp.int32)             # (B*T,)
    pred_flat = pred_args.reshape(-1).astype(jnp.int32)            # (B*(n_sel-1),)
    lens = sentence_lens.astype(jnp.int32)                         # (B,)

    kernel = functools.partial(fused_lstm_head_kernel,
                               batch=B, seq_len=T, hidden_dim=H,
                               vocab_size=V, n_sel=n_sel)
    return pl.pallas_call(
        kernel,
        out_shape=jax.ShapeDtypeStruct((B, 2), jnp.float32),
        grid_spec=pltpu.PrefetchScalarGridSpec(
            num_scalar_prefetch=3,          # sentences, pred_args, sentence_lens -> SMEM
            grid=(1,),                      # single invocation; recurrence is in-kernel
            in_specs=[
                pl.BlockSpec((V, E), lambda i, *_: (0, 0)),        # embedding table
                pl.BlockSpec((E, H4), lambda i, *_: (0, 0)),       # W_ih
                pl.BlockSpec((H, H4), lambda i, *_: (0, 0)),       # W_hh
                pl.BlockSpec((1, H4), lambda i, *_: (0, 0)),       # b_ih + b_hh
                pl.BlockSpec((n_sel * H, 2), lambda i, *_: (0, 0)),  # W_out
                pl.BlockSpec((1, 2), lambda i, *_: (0, 0)),        # b_out
            ],
            out_specs=pl.BlockSpec((B, 2), lambda i, *_: (0, 0)),
        ),
        compiler_params=pltpu.CompilerParams(
            dimension_semantics=("arbitrary",)),
    )(sen_flat, pred_flat, lens,
      params["embedding"], params["w_ih"], params["w_hh"], params["b_lstm"],
      params["w_out"], params["b_out"])


# ----------------------------------- params ------------------------------------------
def init_params(key, vocab_size, embedding_dim, hidden_dim):
    ks = jax.random.split(key, 7)
    s = 1.0 / jnp.sqrt(hidden_dim)
    H4 = 4 * hidden_dim
    emb = jax.random.normal(ks[0], (vocab_size, embedding_dim), jnp.float32)
    # weights stored transposed vs PyTorch: W_ih:[E,4H], W_hh:[H,4H]; gate order i,f,g,o
    w_ih = jax.random.uniform(ks[1], (embedding_dim, H4), jnp.float32, -s, s)
    w_hh = jax.random.uniform(ks[2], (hidden_dim, H4), jnp.float32, -s, s)
    b_ih = jax.random.uniform(ks[3], (H4,), jnp.float32, -s, s)
    b_hh = jax.random.uniform(ks[4], (H4,), jnp.float32, -s, s)
    so = 1.0 / jnp.sqrt(3 * hidden_dim)
    w_out = jax.random.uniform(ks[5], (3 * hidden_dim, 2), jnp.float32, -so, so)
    b_out = jax.random.uniform(ks[6], (1, 2), jnp.float32, -so, so)
    return dict(embedding=emb, w_ih=w_ih, w_hh=w_hh,
                b_lstm=(b_ih + b_hh).reshape(1, H4),
                w_out=w_out, b_out=b_out)


# ----------------------------- pure-JAX reference check ------------------------------
def ref_forward(params, pred_args, sentences, sentence_lens, hidden_dim):
    H = hidden_dim
    embeds = jnp.take(params["embedding"], sentences, axis=0)
    x_tbe = jnp.transpose(embeds, (1, 0, 2))
    B = x_tbe.shape[1]

    def step(carry, x_t):
        h, c = carry
        gates = x_t @ params["w_ih"] + h @ params["w_hh"] + params["b_lstm"]
        i = jax.nn.sigmoid(gates[:, :H]); f = jax.nn.sigmoid(gates[:, H:2 * H])
        g = jnp.tanh(gates[:, 2 * H:3 * H]); o = jax.nn.sigmoid(gates[:, 3 * H:])
        c = f * c + i * g
        h = o * jnp.tanh(c)
        return (h, c), h

    h0 = jnp.zeros((B, H), jnp.float32)
    _, hs = jax.lax.scan(step, (h0, h0), x_tbe)
    lstm_out = jnp.transpose(hs, (1, 0, 2))
    indices = jnp.concatenate([pred_args, (sentence_lens - 1)[:, None]], axis=1)
    selected = jnp.take_along_axis(lstm_out, indices[:, :, None], axis=1)
    selected = selected.reshape(selected.shape[0], -1)
    return selected @ params["w_out"] + params["b_out"]


if __name__ == "__main__":
    B, T, E, H, V = 2, 8, 32, 32, 50   # batch, seq, embedding_dim, hidden_dim, vocab

    key = jax.random.PRNGKey(0)
    kp, ks = jax.random.split(key)
    params = init_params(kp, V, E, H)

    sentences = jax.random.randint(ks, (B, T), 0, V, dtype=jnp.int32)
    sentence_lens = jnp.array([8, 5], dtype=jnp.int32)
    pred_args = jnp.array([[1, 3], [0, 2]], dtype=jnp.int32)  # (B, 2) argument indices

    out = lstm_model_forward(params, pred_args, sentences, sentence_lens)
    out = jax.block_until_ready(out)

    ref = ref_forward(params, pred_args, sentences, sentence_lens, H)
    assert out.shape == (B, 2)
    # Kernel feeds the MXU bf16 inputs (f32 accumulation) per the perf review, so the
    # tolerance vs. the f32 reference is loosened accordingly (typical error ~1e-3).
    assert jnp.allclose(out, ref, atol=2e-2, rtol=2e-2), (out, ref)

    print("KERNEL_OK")
</pallas_src>

<mosaic_0001>
module attributes {stable_mosaic.version = 11 : i64} {
  func.func @fused_lstm_head_kernel(%arg0: i32, %arg1: memref<16xi32, #tpu.memory_space<smem>>, %arg2: memref<4xi32, #tpu.memory_space<smem>>, %arg3: memref<2xi32, #tpu.memory_space<smem>>, %arg4: memref<50x32xf32, #tpu.memory_space<vmem>>, %arg5: memref<32x128xf32, #tpu.memory_space<vmem>>, %arg6: memref<32x128xf32, #tpu.memory_space<vmem>>, %arg7: memref<1x128xf32, #tpu.memory_space<vmem>>, %arg8: memref<96x2xf32, #tpu.memory_space<vmem>>, %arg9: memref<1x2xf32, #tpu.memory_space<vmem>>, %arg10: memref<2x2xf32, #tpu.memory_space<vmem>>) attributes {dimension_semantics = [#tpu.dimension_semantics<arbitrary>], iteration_bounds = array<i64: 1>, scalar_prefetch = 3 : i64, scratch_operands = 0 : i64, tpu.core_type = #tpu.core_type<tc>, window_params = [{pipeline_mode = #tpu.pipeline_mode<synchronous>, transform_indices = @transform_0, window_bounds = array<i64: 50, 32>}, {pipeline_mode = #tpu.pipeline_mode<synchronous>, transform_indices = @transform_1, window_bounds = array<i64: 32, 128>}, {pipeline_mode = #tpu.pipeline_mode<synchronous>, transform_indices = @transform_2, window_bounds = array<i64: 32, 128>}, {pipeline_mode = #tpu.pipeline_mode<synchronous>, transform_indices = @transform_3, window_bounds = array<i64: 1, 128>}, {pipeline_mode = #tpu.pipeline_mode<synchronous>, transform_indices = @transform_4, window_bounds = array<i64: 96, 2>}, {pipeline_mode = #tpu.pipeline_mode<synchronous>, transform_indices = @transform_5, window_bounds = array<i64: 1, 2>}, {pipeline_mode = #tpu.pipeline_mode<synchronous>, transform_indices = @transform_6, window_bounds = array<i64: 2, 2>}]} {
    %0 = tpu.iota {dimensions = array<i32: 1>} : vector<1x50xi32>
    %c0 = arith.constant 0 : index
    %1 = memref.load %arg1[%c0] : memref<16xi32, #tpu.memory_space<smem>>
    %2 = vector.broadcast %1 : i32 to vector<1x50xi32>
    %3 = arith.cmpi eq, %0, %2 : vector<1x50xi32>
    %cst = arith.constant 1.000000e+00 : f32
    %cst_0 = arith.constant 0.000000e+00 : f32
    %4 = vector.broadcast %cst : f32 to vector<1x50xf32>
    %5 = vector.broadcast %cst_0 : f32 to vector<1x50xf32>
    %6 = arith.select %3, %4, %5 : vector<1x50xi1>, vector<1x50xf32>
    %c8 = arith.constant 8 : index
    %7 = memref.load %arg1[%c8] : memref<16xi32, #tpu.memory_space<smem>>
    %8 = vector.broadcast %7 : i32 to vector<1x50xi32>
    %9 = arith.cmpi eq, %0, %8 : vector<1x50xi32>
    %cst_1 = arith.constant 1.000000e+00 : f32
    %cst_2 = arith.constant 0.000000e+00 : f32
    %10 = vector.broadcast %cst_1 : f32 to vector<1x50xf32>
    %11 = vector.broadcast %cst_2 : f32 to vector<1x50xf32>
    %12 = arith.select %9, %10, %11 : vector<1x50xi1>, vector<1x50xf32>
    %c1 = arith.constant 1 : index
    %13 = memref.load %arg1[%c1] : memref<16xi32, #tpu.memory_space<smem>>
    %14 = vector.broadcast %13 : i32 to vector<1x50xi32>
    %15 = arith.cmpi eq, %0, %14 : vector<1x50xi32>
    %cst_3 = arith.constant 1.000000e+00 : f32
    %cst_4 = arith.constant 0.000000e+00 : f32
    %16 = vector.broadcast %cst_3 : f32 to vector<1x50xf32>
    %17 = vector.broadcast %cst_4 : f32 to vector<1x50xf32>
    %18 = arith.select %15, %16, %17 : vector<1x50xi1>, vector<1x50xf32>
    %c9 = arith.constant 9 : index
    %19 = memref.load %arg1[%c9] : memref<16xi32, #tpu.memory_space<smem>>
    %20 = vector.broadcast %19 : i32 to vector<1x50xi32>
    %21 = arith.cmpi eq, %0, %20 : vector<1x50xi32>
    %cst_5 = arith.constant 1.000000e+00 : f32
    %cst_6 = arith.constant 0.000000e+00 : f32
    %22 = vector.broadcast %cst_5 : f32 to vector<1x50xf32>
    %23 = vector.broadcast %cst_6 : f32 to vector<1x50xf32>
    %24 = arith.select %21, %22, %23 : vector<1x50xi1>, vector<1x50xf32>
    %c2 = arith.constant 2 : index
    %25 = memref.load %arg1[%c2] : memref<16xi32, #tpu.memory_space<smem>>
    %26 = vector.broadcast %25 : i32 to vector<1x50xi32>
    %27 = arith.cmpi eq, %0, %26 : vector<1x50xi32>
    %cst_7 = arith.constant 1.000000e+00 : f32
    %cst_8 = arith.constant 0.000000e+00 : f32
    %28 = vector.broadcast %cst_7 : f32 to vector<1x50xf32>
    %29 = vector.broadcast %cst_8 : f32 to vector<1x50xf32>
    %30 = arith.select %27, %28, %29 : vector<1x50xi1>, vector<1x50xf32>
    %c10 = arith.constant 10 : index
    %31 = memref.load %arg1[%c10] : memref<16xi32, #tpu.memory_space<smem>>
    %32 = vector.broadcast %31 : i32 to vector<1x50xi32>
    %33 = arith.cmpi eq, %0, %32 : vector<1x50xi32>
    %cst_9 = arith.constant 1.000000e+00 : f32
    %cst_10 = arith.constant 0.000000e+00 : f32
    %34 = vector.broadcast %cst_9 : f32 to vector<1x50xf32>
    %35 = vector.broadcast %cst_10 : f32 to vector<1x50xf32>
    %36 = arith.select %33, %34, %35 : vector<1x50xi1>, vector<1x50xf32>
    %c3 = arith.constant 3 : index
    %37 = memref.load %arg1[%c3] : memref<16xi32, #tpu.memory_space<smem>>
    %38 = vector.broadcast %37 : i32 to vector<1x50xi32>
    %39 = arith.cmpi eq, %0, %38 : vector<1x50xi32>
    %cst_11 = arith.constant 1.000000e+00 : f32
    %cst_12 = arith.constant 0.000000e+00 : f32
    %40 = vector.broadcast %cst_11 : f32 to vector<1x50xf32>
    %41 = vector.broadcast %cst_12 : f32 to vector<1x50xf32>
    %42 = arith.select %39, %40, %41 : vector<1x50xi1>, vector<1x50xf32>
    %c11 = arith.constant 11 : index
    %43 = memref.load %arg1[%c11] : memref<16xi32, #tpu.memory_space<smem>>
    %44 = vector.broadcast %43 : i32 to vector<1x50xi32>
    %45 = arith.cmpi eq, %0, %44 : vector<1x50xi32>
    %cst_13 = arith.constant 1.000000e+00 : f32
    %cst_14 = arith.constant 0.000000e+00 : f32
    %46 = vector.broadcast %cst_13 : f32 to vector<1x50xf32>
    %47 = vector.broadcast %cst_14 : f32 to vector<1x50xf32>
    %48 = arith.select %45, %46, %47 : vector<1x50xi1>, vector<1x50xf32>
    %c4 = arith.constant 4 : index
    %49 = memref.load %arg1[%c4] : memref<16xi32, #tpu.memory_space<smem>>
    %50 = vector.broadcast %49 : i32 to vector<1x50xi32>
    %51 = arith.cmpi eq, %0, %50 : vector<1x50xi32>
    %cst_15 = arith.constant 1.000000e+00 : f32
    %cst_16 = arith.constant 0.000000e+00 : f32
    %52 = vector.broadcast %cst_15 : f32 to vector<1x50xf32>
    %53 = vector.broadcast %cst_16 : f32 to vector<1x50xf32>
    %54 = arith.select %51, %52, %53 : vector<1x50xi1>, vector<1x50xf32>
    %c12 = arith.constant 12 : index
    %55 = memref.load %arg1[%c12] : memref<16xi32, #tpu.memory_space<smem>>
    %56 = vector.broadcast %55 : i32 to vector<1x50xi32>
    %57 = arith.cmpi eq, %0, %56 : vector<1x50xi32>
    %cst_17 = arith.constant 1.000000e+00 : f32
    %cst_18 = arith.constant 0.000000e+00 : f32
    %58 = vector.broadcast %cst_17 : f32 to vector<1x50xf32>
    %59 = vector.broadcast %cst_18 : f32 to vector<1x50xf32>
    %60 = arith.select %57, %58, %59 : vector<1x50xi1>, vector<1x50xf32>
    %c5 = arith.constant 5 : index
    %61 = memref.load %arg1[%c5] : memref<16xi32, #tpu.memory_space<smem>>
    %62 = vector.broadcast %61 : i32 to vector<1x50xi32>
    %63 = arith.cmpi eq, %0, %62 : vector<1x50xi32>
    %cst_19 = arith.constant 1.000000e+00 : f32
    %cst_20 = arith.constant 0.000000e+00 : f32
    %64 = vector.broadcast %cst_19 : f32 to vector<1x50xf32>
    %65 = vector.broadcast %cst_20 : f32 to vector<1x50xf32>
    %66 = arith.select %63, %64, %65 : vector<1x50xi1>, vector<1x50xf32>
    %c13 = arith.constant 13 : index
    %67 = memref.load %arg1[%c13] : memref<16xi32, #tpu.memory_space<smem>>
    %68 = vector.broadcast %67 : i32 to vector<1x50xi32>
    %69 = arith.cmpi eq, %0, %68 : vector<1x50xi32>
    %cst_21 = arith.constant 1.000000e+00 : f32
    %cst_22 = arith.constant 0.000000e+00 : f32
    %70 = vector.broadcast %cst_21 : f32 to vector<1x50xf32>
    %71 = vector.broadcast %cst_22 : f32 to vector<1x50xf32>
    %72 = arith.select %69, %70, %71 : vector<1x50xi1>, vector<1x50xf32>
    %c6 = arith.constant 6 : index
    %73 = memref.load %arg1[%c6] : memref<16xi32, #tpu.memory_space<smem>>
    %74 = vector.broadcast %73 : i32 to vector<1x50xi32>
    %75 = arith.cmpi eq, %0, %74 : vector<1x50xi32>
    %cst_23 = arith.constant 1.000000e+00 : f32
    %cst_24 = arith.constant 0.000000e+00 : f32
    %76 = vector.broadcast %cst_23 : f32 to vector<1x50xf32>
    %77 = vector.broadcast %cst_24 : f32 to vector<1x50xf32>
    %78 = arith.select %75, %76, %77 : vector<1x50xi1>, vector<1x50xf32>
    %c14 = arith.constant 14 : index
    %79 = memref.load %arg1[%c14] : memref<16xi32, #tpu.memory_space<smem>>
    %80 = vector.broadcast %79 : i32 to vector<1x50xi32>
    %81 = arith.cmpi eq, %0, %80 : vector<1x50xi32>
    %cst_25 = arith.constant 1.000000e+00 : f32
    %cst_26 = arith.constant 0.000000e+00 : f32
    %82 = vector.broadcast %cst_25 : f32 to vector<1x50xf32>
    %83 = vector.broadcast %cst_26 : f32 to vector<1x50xf32>
    %84 = arith.select %81, %82, %83 : vector<1x50xi1>, vector<1x50xf32>
    %c7 = arith.constant 7 : index
    %85 = memref.load %arg1[%c7] : memref<16xi32, #tpu.memory_space<smem>>
    %86 = vector.broadcast %85 : i32 to vector<1x50xi32>
    %87 = arith.cmpi eq, %0, %86 : vector<1x50xi32>
    %cst_27 = arith.constant 1.000000e+00 : f32
    %cst_28 = arith.constant 0.000000e+00 : f32
    %88 = vector.broadcast %cst_27 : f32 to vector<1x50xf32>
    %89 = vector.broadcast %cst_28 : f32 to vector<1x50xf32>
    %90 = arith.select %87, %88, %89 : vector<1x50xi1>, vector<1x50xf32>
    %c15 = arith.constant 15 : index
    %91 = memref.load %arg1[%c15] : memref<16xi32, #tpu.memory_space<smem>>
    %92 = vector.broadcast %91 : i32 to vector<1x50xi32>
    %93 = arith.cmpi eq, %0, %92 : vector<1x50xi32>
    %cst_29 = arith.constant 1.000000e+00 : f32
    %cst_30 = arith.constant 0.000000e+00 : f32
    %94 = vector.broadcast %cst_29 : f32 to vector<1x50xf32>
    %95 = vector.broadcast %cst_30 : f32 to vector<1x50xf32>
    %96 = arith.select %93, %94, %95 : vector<1x50xi1>, vector<1x50xf32>
    %97 = tpu.concatenate %6, %12, %18, %24, %30, %36, %42, %48, %54, %60, %66, %72, %78, %84, %90, %96 in 0 : vector<1x50xf32>, vector<1x50xf32>, vector<1x50xf32>, vector<1x50xf32>, vector<1x50xf32>, vector<1x50xf32>, vector<1x50xf32>, vector<1x50xf32>, vector<1x50xf32>, vector<1x50xf32>, vector<1x50xf32>, vector<1x50xf32>, vector<1x50xf32>, vector<1x50xf32>, vector<1x50xf32>, vector<1x50xf32> -> vector<16x50xf32>
    %98 = arith.truncf %97 : vector<16x50xf32> to vector<16x50xbf16>
    %c0_31 = arith.constant 0 : index
    %c0_32 = arith.constant 0 : index
    %99 = vector.load %arg4[%c0_31, %c0_32] : memref<50x32xf32, #tpu.memory_space<vmem>>, vector<50x32xf32>
    %100 = arith.truncf %99 : vector<50x32xf32> to vector<50x32xbf16>
    %cst_33 = arith.constant dense<0.000000e+00> : vector<16x32xf32>
    %101 = tpu.matmul %98, %100, %cst_33 {dimension_numbers = #tpu.dot_dimension_numbers<[1], [0], [0], [1], [0, 0, 1, 1], [], []>} : vector<16x50xbf16>, vector<50x32xbf16>, vector<16x32xf32> -> vector<16x32xf32>
    %102 = arith.truncf %101 : vector<16x32xf32> to vector<16x32xbf16>
    %c0_34 = arith.constant 0 : index
    %c0_35 = arith.constant 0 : index
    %103 = vector.load %arg5[%c0_34, %c0_35] : memref<32x128xf32, #tpu.memory_space<vmem>>, vector<32x128xf32>
    %104 = arith.truncf %103 : vector<32x128xf32> to vector<32x128xbf16>
    %cst_36 = arith.constant dense<0.000000e+00> : vector<16x128xf32>
    %105 = tpu.matmul %102, %104, %cst_36 {dimension_numbers = #tpu.dot_dimension_numbers<[1], [0], [0], [1], [0, 0, 1, 1], [], []>} : vector<16x32xbf16>, vector<32x128xbf16>, vector<16x128xf32> -> vector<16x128xf32>
    %c0_37 = arith.constant 0 : index
    %c0_38 = arith.constant 0 : index
    %106 = vector.load %arg7[%c0_37, %c0_38] : memref<1x128xf32, #tpu.memory_space<vmem>>, vector<1x128xf32>
    %107 = vector.broadcast %106 : vector<1x128xf32> to vector<16x128xf32>
    %108 = arith.addf %105, %107 : vector<16x128xf32>
    %c0_39 = arith.constant 0 : index
    %c0_40 = arith.constant 0 : index
    %109 = vector.load %arg6[%c0_39, %c0_40] : memref<32x128xf32, #tpu.memory_space<vmem>>, vector<32x128xf32>
    %110 = arith.truncf %109 : vector<32x128xf32> to vector<32x128xbf16>
    %c0_41 = arith.constant 0 : index
    %111 = memref.load %arg2[%c0_41] : memref<4xi32, #tpu.memory_space<smem>>
    %c1_42 = arith.constant 1 : index
    %112 = memref.load %arg2[%c1_42] : memref<4xi32, #tpu.memory_space<smem>>
    %c0_43 = arith.constant 0 : index
    %113 = memref.load %arg3[%c0_43] : memref<2xi32, #tpu.memory_space<smem>>
    %c1_i32 = arith.constant 1 : i32
    %114 = arith.subi %113, %c1_i32 : i32
    %c2_44 = arith.constant 2 : index
    %115 = memref.load %arg2[%c2_44] : memref<4xi32, #tpu.memory_space<smem>>
    %c3_45 = arith.constant 3 : index
    %116 = memref.load %arg2[%c3_45] : memref<4xi32, #tpu.memory_space<smem>>
    %c1_46 = arith.constant 1 : index
    %117 = memref.load %arg3[%c1_46] : memref<2xi32, #tpu.memory_space<smem>>
    %c1_i32_47 = arith.constant 1 : i32
    %118 = arith.subi %117, %c1_i32_47 : i32
    %cst_48 = arith.constant 0.000000e+00 : f32
    %119 = vector.broadcast %cst_48 : f32 to vector<2x32xf32>
    %cst_49 = arith.constant 0.000000e+00 : f32
    %120 = vector.broadcast %cst_49 : f32 to vector<2x32xf32>
    %cst_50 = arith.constant 0.000000e+00 : f32
    %121 = vector.broadcast %cst_50 : f32 to vector<1x32xf32>
    %cst_51 = arith.constant 0.000000e+00 : f32
    %122 = vector.broadcast %cst_51 : f32 to vector<1x32xf32>
    %cst_52 = arith.constant 0.000000e+00 : f32
    %123 = vector.broadcast %cst_52 : f32 to vector<1x32xf32>
    %cst_53 = arith.constant 0.000000e+00 : f32
    %124 = vector.broadcast %cst_53 : f32 to vector<1x32xf32>
    %cst_54 = arith.constant 0.000000e+00 : f32
    %125 = vector.broadcast %cst_54 : f32 to vector<1x32xf32>
    %cst_55 = arith.constant 0.000000e+00 : f32
    %126 = vector.broadcast %cst_55 : f32 to vector<1x32xf32>
    %127 = vector.extract_strided_slice %108 {offsets = [0, 0], sizes = [2, 128], strides = [1, 1]} : vector<16x128xf32> to vector<2x128xf32>
    %128 = arith.truncf %119 : vector<2x32xf32> to vector<2x32xbf16>
    %cst_56 = arith.constant dense<0.000000e+00> : vector<2x128xf32>
    %129 = tpu.matmul %128, %110, %cst_56 {dimension_numbers = #tpu.dot_dimension_numbers<[1], [0], [0], [1], [0, 0, 1, 1], [], []>} : vector<2x32xbf16>, vector<32x128xbf16>, vector<2x128xf32> -> vector<2x128xf32>
    %130 = arith.addf %127, %129 : vector<2x128xf32>
    %131 = arith.negf %130 : vector<2x128xf32>
    %132 = math.exp %131 : vector<2x128xf32>
    %cst_57 = arith.constant 1.000000e+00 : f32
    %133 = vector.broadcast %cst_57 : f32 to vector<2x128xf32>
    %134 = arith.addf %133, %132 : vector<2x128xf32>
    %135 = arith.divf %133, %134 : vector<2x128xf32>
    %136 = math.tanh %130 : vector<2x128xf32>
    %137 = vector.extract_strided_slice %135 {offsets = [0, 0], sizes = [2, 32], strides = [1, 1]} : vector<2x128xf32> to vector<2x32xf32>
    %138 = vector.extract_strided_slice %135 {offsets = [0, 32], sizes = [2, 32], strides = [1, 1]} : vector<2x128xf32> to vector<2x32xf32>
    %139 = vector.extract_strided_slice %136 {offsets = [0, 64], sizes = [2, 32], strides = [1, 1]} : vector<2x128xf32> to vector<2x32xf32>
    %140 = vector.extract_strided_slice %135 {offsets = [0, 96], sizes = [2, 32], strides = [1, 1]} : vector<2x128xf32> to vector<2x32xf32>
    %141 = arith.mulf %138, %120 : vector<2x32xf32>
    %142 = arith.mulf %137, %139 : vector<2x32xf32>
    %143 = arith.addf %141, %142 : vector<2x32xf32>
    %144 = math.tanh %143 : vector<2x32xf32>
    %145 = arith.mulf %140, %144 : vector<2x32xf32>
    %146 = vector.extract_strided_slice %145 {offsets = [0, 0], sizes = [1, 32], strides = [1, 1]} : vector<2x32xf32> to vector<1x32xf32>
    %c0_i32 = arith.constant 0 : i32
    %147 = arith.cmpi eq, %111, %c0_i32 : i32
    %148 = arith.select %147, %146, %121 : vector<1x32xf32>
    %c0_i32_58 = arith.constant 0 : i32
    %149 = arith.cmpi eq, %112, %c0_i32_58 : i32
    %150 = arith.select %149, %146, %122 : vector<1x32xf32>
    %c0_i32_59 = arith.constant 0 : i32
    %151 = arith.cmpi eq, %114, %c0_i32_59 : i32
    %152 = arith.select %151, %146, %123 : vector<1x32xf32>
    %153 = vector.extract_strided_slice %145 {offsets = [1, 0], sizes = [1, 32], strides = [1, 1]} : vector<2x32xf32> to vector<1x32xf32>
    %c0_i32_60 = arith.constant 0 : i32
    %154 = arith.cmpi eq, %115, %c0_i32_60 : i32
    %155 = arith.select %154, %153, %124 : vector<1x32xf32>
    %c0_i32_61 = arith.constant 0 : i32
    %156 = arith.cmpi eq, %116, %c0_i32_61 : i32
    %157 = arith.select %156, %153, %125 : vector<1x32xf32>
    %c0_i32_62 = arith.constant 0 : i32
    %158 = arith.cmpi eq, %118, %c0_i32_62 : i32
    %159 = arith.select %158, %153, %126 : vector<1x32xf32>
    %160 = vector.extract_strided_slice %108 {offsets = [2, 0], sizes = [2, 128], strides = [1, 1]} : vector<16x128xf32> to vector<2x128xf32>
    %161 = arith.truncf %145 : vector<2x32xf32> to vector<2x32xbf16>
    %cst_63 = arith.constant dense<0.000000e+00> : vector<2x128xf32>
    %162 = tpu.matmul %161, %110, %cst_63 {dimension_numbers = #tpu.dot_dimension_numbers<[1], [0], [0], [1], [0, 0, 1, 1], [], []>} : vector<2x32xbf16>, vector<32x128xbf16>, vector<2x128xf32> -> vector<2x128xf32>
    %163 = arith.addf %160, %162 : vector<2x128xf32>
    %164 = arith.negf %163 : vector<2x128xf32>
    %165 = math.exp %164 : vector<2x128xf32>
    %cst_64 = arith.constant 1.000000e+00 : f32
    %166 = vector.broadcast %cst_64 : f32 to vector<2x128xf32>
    %167 = arith.addf %166, %165 : vector<2x128xf32>
    %168 = arith.divf %166, %167 : vector<2x128xf32>
    %169 = math.tanh %163 : vector<2x128xf32>
    %170 = vector.extract_strided_slice %168 {offsets = [0, 0], sizes = [2, 32], strides = [1, 1]} : vector<2x128xf32> to vector<2x32xf32>
    %171 = vector.extract_strided_slice %168 {offsets = [0, 32], sizes = [2, 32], strides = [1, 1]} : vector<2x128xf32> to vector<2x32xf32>
    %172 = vector.extract_strided_slice %169 {offsets = [0, 64], sizes = [2, 32], strides = [1, 1]} : vector<2x128xf32> to vector<2x32xf32>
    %173 = vector.extract_strided_slice %168 {offsets = [0, 96], sizes = [2, 32], strides = [1, 1]} : vector<2x128xf32> to vector<2x32xf32>
    %174 = arith.mulf %171, %143 : vector<2x32xf32>
    %175 = arith.mulf %170, %172 : vector<2x32xf32>
    %176 = arith.addf %174, %175 : vector<2x32xf32>
    %177 = math.tanh %176 : vector<2x32xf32>
    %178 = arith.mulf %173, %177 : vector<2x32xf32>
    %179 = vector.extract_strided_slice %178 {offsets = [0, 0], sizes = [1, 32], strides = [1, 1]} : vector<2x32xf32> to vector<1x32xf32>
    %c1_i32_65 = arith.constant 1 : i32
    %180 = arith.cmpi eq, %111, %c1_i32_65 : i32
    %181 = arith.select %180, %179, %148 : vector<1x32xf32>
    %c1_i32_66 = arith.constant 1 : i32
    %182 = arith.cmpi eq, %112, %c1_i32_66 : i32
    %183 = arith.select %182, %179, %150 : vector<1x32xf32>
    %c1_i32_67 = arith.constant 1 : i32
    %184 = arith.cmpi eq, %114, %c1_i32_67 : i32
    %185 = arith.select %184, %179, %152 : vector<1x32xf32>
    %186 = vector.extract_strided_slice %178 {offsets = [1, 0], sizes = [1, 32], strides = [1, 1]} : vector<2x32xf32> to vector<1x32xf32>
    %c1_i32_68 = arith.constant 1 : i32
    %187 = arith.cmpi eq, %115, %c1_i32_68 : i32
    %188 = arith.select %187, %186, %155 : vector<1x32xf32>
    %c1_i32_69 = arith.constant 1 : i32
    %189 = arith.cmpi eq, %116, %c1_i32_69 : i32
    %190 = arith.select %189, %186, %157 : vector<1x32xf32>
    %c1_i32_70 = arith.constant 1 : i32
    %191 = arith.cmpi eq, %118, %c1_i32_70 : i32
    %192 = arith.select %191, %186, %159 : vector<1x32xf32>
    %193 = vector.extract_strided_slice %108 {offsets = [4, 0], sizes = [2, 128], strides = [1, 1]} : vector<16x128xf32> to vector<2x128xf32>
    %194 = arith.truncf %178 : vector<2x32xf32> to vector<2x32xbf16>
    %cst_71 = arith.constant dense<0.000000e+00> : vector<2x128xf32>
    %195 = tpu.matmul %194, %110, %cst_71 {dimension_numbers = #tpu.dot_dimension_numbers<[1], [0], [0], [1], [0, 0, 1, 1], [], []>} : vector<2x32xbf16>, vector<32x128xbf16>, vector<2x128xf32> -> vector<2x128xf32>
    %196 = arith.addf %193, %195 : vector<2x128xf32>
    %197 = arith.negf %196 : vector<2x128xf32>
    %198 = math.exp %197 : vector<2x128xf32>
    %cst_72 = arith.constant 1.000000e+00 : f32
    %199 = vector.broadcast %cst_72 : f32 to vector<2x128xf32>
    %200 = arith.addf %199, %198 : vector<2x128xf32>
    %201 = arith.divf %199, %200 : vector<2x128xf32>
    %202 = math.tanh %196 : vector<2x128xf32>
    %203 = vector.extract_strided_slice %201 {offsets = [0, 0], sizes = [2, 32], strides = [1, 1]} : vector<2x128xf32> to vector<2x32xf32>
    %204 = vector.extract_strided_slice %201 {offsets = [0, 32], sizes = [2, 32], strides = [1, 1]} : vector<2x128xf32> to vector<2x32xf32>
    %205 = vector.extract_strided_slice %202 {offsets = [0, 64], sizes = [2, 32], strides = [1, 1]} : vector<2x128xf32> to vector<2x32xf32>
    %206 = vector.extract_strided_slice %201 {offsets = [0, 96], sizes = [2, 32], strides = [1, 1]} : vector<2x128xf32> to vector<2x32xf32>
    %207 = arith.mulf %204, %176 : vector<2x32xf32>
    %208 = arith.mulf %203, %205 : vector<2x32xf32>
    %209 = arith.addf %207, %208 : vector<2x32xf32>
    %210 = math.tanh %209 : vector<2x32xf32>
    %211 = arith.mulf %206, %210 : vector<2x32xf32>
    %212 = vector.extract_strided_slice %211 {offsets = [0, 0], sizes = [1, 32], strides = [1, 1]} : vector<2x32xf32> to vector<1x32xf32>
    %c2_i32 = arith.constant 2 : i32
    %213 = arith.cmpi eq, %111, %c2_i32 : i32
    %214 = arith.select %213, %212, %181 : vector<1x32xf32>
    %c2_i32_73 = arith.constant 2 : i32
    %215 = arith.cmpi eq, %112, %c2_i32_73 : i32
    %216 = arith.select %215, %212, %183 : vector<1x32xf32>
    %c2_i32_74 = arith.constant 2 : i32
    %217 = arith.cmpi eq, %114, %c2_i32_74 : i32
    %218 = arith.select %217, %212, %185 : vector<1x32xf32>
    %219 = vector.extract_strided_slice %211 {offsets = [1, 0], sizes = [1, 32], strides = [1, 1]} : vector<2x32xf32> to vector<1x32xf32>
    %c2_i32_75 = arith.constant 2 : i32
    %220 = arith.cmpi eq, %115, %c2_i32_75 : i32
    %221 = arith.select %220, %219, %188 : vector<1x32xf32>
    %c2_i32_76 = arith.constant 2 : i32
    %222 = arith.cmpi eq, %116, %c2_i32_76 : i32
    %223 = arith.select %222, %219, %190 : vector<1x32xf32>
    %c2_i32_77 = arith.constant 2 : i32
    %224 = arith.cmpi eq, %118, %c2_i32_77 : i32
    %225 = arith.select %224, %219, %192 : vector<1x32xf32>
    %226 = vector.extract_strided_slice %108 {offsets = [6, 0], sizes = [2, 128], strides = [1, 1]} : vector<16x128xf32> to vector<2x128xf32>
    %227 = arith.truncf %211 : vector<2x32xf32> to vector<2x32xbf16>
    %cst_78 = arith.constant dense<0.000000e+00> : vector<2x128xf32>
    %228 = tpu.matmul %227, %110, %cst_78 {dimension_numbers = #tpu.dot_dimension_numbers<[1], [0], [0], [1], [0, 0, 1, 1], [], []>} : vector<2x32xbf16>, vector<32x128xbf16>, vector<2x128xf32> -> vector<2x128xf32>
    %229 = arith.addf %226, %228 : vector<2x128xf32>
    %230 = arith.negf %229 : vector<2x128xf32>
    %231 = math.exp %230 : vector<2x128xf32>
    %cst_79 = arith.constant 1.000000e+00 : f32
    %232 = vector.broadcast %cst_79 : f32 to vector<2x128xf32>
    %233 = arith.addf %232, %231 : vector<2x128xf32>
    %234 = arith.divf %232, %233 : vector<2x128xf32>
    %235 = math.tanh %229 : vector<2x128xf32>
    %236 = vector.extract_strided_slice %234 {offsets = [0, 0], sizes = [2, 32], strides = [1, 1]} : vector<2x128xf32> to vector<2x32xf32>
    %237 = vector.extract_strided_slice %234 {offsets = [0, 32], sizes = [2, 32], strides = [1, 1]} : vector<2x128xf32> to vector<2x32xf32>
    %238 = vector.extract_strided_slice %235 {offsets = [0, 64], sizes = [2, 32], strides = [1, 1]} : vector<2x128xf32> to vector<2x32xf32>
    %239 = vector.extract_strided_slice %234 {offsets = [0, 96], sizes = [2, 32], strides = [1, 1]} : vector<2x128xf32> to vector<2x32xf32>
    %240 = arith.mulf %237, %209 : vector<2x32xf32>
    %241 = arith.mulf %236, %238 : vector<2x32xf32>
    %242 = arith.addf %240, %241 : vector<2x32xf32>
    %243 = math.tanh %242 : vector<2x32xf32>
    %244 = arith.mulf %239, %243 : vector<2x32xf32>
    %245 = vector.extract_strided_slice %244 {offsets = [0, 0], sizes = [1, 32], strides = [1, 1]} : vector<2x32xf32> to vector<1x32xf32>
    %c3_i32 = arith.constant 3 : i32
    %246 = arith.cmpi eq, %111, %c3_i32 : i32
    %247 = arith.select %246, %245, %214 : vector<1x32xf32>
    %c3_i32_80 = arith.constant 3 : i32
    %248 = arith.cmpi eq, %112, %c3_i32_80 : i32
    %249 = arith.select %248, %245, %216 : vector<1x32xf32>
    %c3_i32_81 = arith.constant 3 : i32
    %250 = arith.cmpi eq, %114, %c3_i32_81 : i32
    %251 = arith.select %250, %245, %218 : vector<1x32xf32>
    %252 = vector.extract_strided_slice %244 {offsets = [1, 0], sizes = [1, 32], strides = [1, 1]} : vector<2x32xf32> to vector<1x32xf32>
    %c3_i32_82 = arith.constant 3 : i32
    %253 = arith.cmpi eq, %115, %c3_i32_82 : i32
    %254 = arith.select %253, %252, %221 : vector<1x32xf32>
    %c3_i32_83 = arith.constant 3 : i32
    %255 = arith.cmpi eq, %116, %c3_i32_83 : i32
    %256 = arith.select %255, %252, %223 : vector<1x32xf32>
    %c3_i32_84 = arith.constant 3 : i32
    %257 = arith.cmpi eq, %118, %c3_i32_84 : i32
    %258 = arith.select %257, %252, %225 : vector<1x32xf32>
    %259 = vector.extract_strided_slice %108 {offsets = [8, 0], sizes = [2, 128], strides = [1, 1]} : vector<16x128xf32> to vector<2x128xf32>
    %260 = arith.truncf %244 : vector<2x32xf32> to vector<2x32xbf16>
    %cst_85 = arith.constant dense<0.000000e+00> : vector<2x128xf32>
    %261 = tpu.matmul %260, %110, %cst_85 {dimension_numbers = #tpu.dot_dimension_numbers<[1], [0], [0], [1], [0, 0, 1, 1], [], []>} : vector<2x32xbf16>, vector<32x128xbf16>, vector<2x128xf32> -> vector<2x128xf32>
    %262 = arith.addf %259, %261 : vector<2x128xf32>
    %263 = arith.negf %262 : vector<2x128xf32>
    %264 = math.exp %263 : vector<2x128xf32>
    %cst_86 = arith.constant 1.000000e+00 : f32
    %265 = vector.broadcast %cst_86 : f32 to vector<2x128xf32>
    %266 = arith.addf %265, %264 : vector<2x128xf32>
    %267 = arith.divf %265, %266 : vector<2x128xf32>
    %268 = math.tanh %262 : vector<2x128xf32>
    %269 = vector.extract_strided_slice %267 {offsets = [0, 0], sizes = [2, 32], strides = [1, 1]} : vector<2x128xf32> to vector<2x32xf32>
    %270 = vector.extract_strided_slice %267 {offsets = [0, 32], sizes = [2, 32], strides = [1, 1]} : vector<2x128xf32> to vector<2x32xf32>
    %271 = vector.extract_strided_slice %268 {offsets = [0, 64], sizes = [2, 32], strides = [1, 1]} : vector<2x128xf32> to vector<2x32xf32>
    %272 = vector.extract_strided_slice %267 {offsets = [0, 96], sizes = [2, 32], strides = [1, 1]} : vector<2x128xf32> to vector<2x32xf32>
    %273 = arith.mulf %270, %242 : vector<2x32xf32>
    %274 = arith.mulf %269, %271 : vector<2x32xf32>
    %275 = arith.addf %273, %274 : vector<2x32xf32>
    %276 = math.tanh %275 : vector<2x32xf32>
    %277 = arith.mulf %272, %276 : vector<2x32xf32>
    %278 = vector.extract_strided_slice %277 {offsets = [0, 0], sizes = [1, 32], strides = [1, 1]} : vector<2x32xf32> to vector<1x32xf32>
    %c4_i32 = arith.constant 4 : i32
    %279 = arith.cmpi eq, %111, %c4_i32 : i32
    %280 = arith.select %279, %278, %247 : vector<1x32xf32>
    %c4_i32_87 = arith.constant 4 : i32
    %281 = arith.cmpi eq, %112, %c4_i32_87 : i32
    %282 = arith.select %281, %278, %249 : vector<1x32xf32>
    %c4_i32_88 = arith.constant 4 : i32
    %283 = arith.cmpi eq, %114, %c4_i32_88 : i32
    %284 = arith.select %283, %278, %251 : vector<1x32xf32>
    %285 = vector.extract_strided_slice %277 {offsets = [1, 0], sizes = [1, 32], strides = [1, 1]} : vector<2x32xf32> to vector<1x32xf32>
    %c4_i32_89 = arith.constant 4 : i32
    %286 = arith.cmpi eq, %115, %c4_i32_89 : i32
    %287 = arith.select %286, %285, %254 : vector<1x32xf32>
    %c4_i32_90 = arith.constant 4 : i32
    %288 = arith.cmpi eq, %116, %c4_i32_90 : i32
    %289 = arith.select %288, %285, %256 : vector<1x32xf32>
    %c4_i32_91 = arith.constant 4 : i32
    %290 = arith.cmpi eq, %118, %c4_i32_91 : i32
    %291 = arith.select %290, %285, %258 : vector<1x32xf32>
    %292 = vector.extract_strided_slice %108 {offsets = [10, 0], sizes = [2, 128], strides = [1, 1]} : vector<16x128xf32> to vector<2x128xf32>
    %293 = arith.truncf %277 : vector<2x32xf32> to vector<2x32xbf16>
    %cst_92 = arith.constant dense<0.000000e+00> : vector<2x128xf32>
    %294 = tpu.matmul %293, %110, %cst_92 {dimension_numbers = #tpu.dot_dimension_numbers<[1], [0], [0], [1], [0, 0, 1, 1], [], []>} : vector<2x32xbf16>, vector<32x128xbf16>, vector<2x128xf32> -> vector<2x128xf32>
    %295 = arith.addf %292, %294 : vector<2x128xf32>
    %296 = arith.negf %295 : vector<2x128xf32>
    %297 = math.exp %296 : vector<2x128xf32>
    %cst_93 = arith.constant 1.000000e+00 : f32
    %298 = vector.broadcast %cst_93 : f32 to vector<2x128xf32>
    %299 = arith.addf %298, %297 : vector<2x128xf32>
    %300 = arith.divf %298, %299 : vector<2x128xf32>
    %301 = math.tanh %295 : vector<2x128xf32>
    %302 = vector.extract_strided_slice %300 {offsets = [0, 0], sizes = [2, 32], strides = [1, 1]} : vector<2x128xf32> to vector<2x32xf32>
    %303 = vector.extract_strided_slice %300 {offsets = [0, 32], sizes = [2, 32], strides = [1, 1]} : vector<2x128xf32> to vector<2x32xf32>
    %304 = vector.extract_strided_slice %301 {offsets = [0, 64], sizes = [2, 32], strides = [1, 1]} : vector<2x128xf32> to vector<2x32xf32>
    %305 = vector.extract_strided_slice %300 {offsets = [0, 96], sizes = [2, 32], strides = [1, 1]} : vector<2x128xf32> to vector<2x32xf32>
    %306 = arith.mulf %303, %275 : vector<2x32xf32>
    %307 = arith.mulf %302, %304 : vector<2x32xf32>
    %308 = arith.addf %306, %307 : vector<2x32xf32>
    %309 = math.tanh %308 : vector<2x32xf32>
    %310 = arith.mulf %305, %309 : vector<2x32xf32>
    %311 = vector.extract_strided_slice %310 {offsets = [0, 0], sizes = [1, 32], strides = [1, 1]} : vector<2x32xf32> to vector<1x32xf32>
    %c5_i32 = arith.constant 5 : i32
    %312 = arith.cmpi eq, %111, %c5_i32 : i32
    %313 = arith.select %312, %311, %280 : vector<1x32xf32>
    %c5_i32_94 = arith.constant 5 : i32
    %314 = arith.cmpi eq, %112, %c5_i32_94 : i32
    %315 = arith.select %314, %311, %282 : vector<1x32xf32>
    %c5_i32_95 = arith.constant 5 : i32
    %316 = arith.cmpi eq, %114, %c5_i32_95 : i32
    %317 = arith.select %316, %311, %284 : vector<1x32xf32>
    %318 = vector.extract_strided_slice %310 {offsets = [1, 0], sizes = [1, 32], strides = [1, 1]} : vector<2x32xf32> to vector<1x32xf32>
    %c5_i32_96 = arith.constant 5 : i32
    %319 = arith.cmpi eq, %115, %c5_i32_96 : i32
    %320 = arith.select %319, %318, %287 : vector<1x32xf32>
    %c5_i32_97 = arith.constant 5 : i32
    %321 = arith.cmpi eq, %116, %c5_i32_97 : i32
    %322 = arith.select %321, %318, %289 : vector<1x32xf32>
    %c5_i32_98 = arith.constant 5 : i32
    %323 = arith.cmpi eq, %118, %c5_i32_98 : i32
    %324 = arith.select %323, %318, %291 : vector<1x32xf32>
    %325 = vector.extract_strided_slice %108 {offsets = [12, 0], sizes = [2, 128], strides = [1, 1]} : vector<16x128xf32> to vector<2x128xf32>
    %326 = arith.truncf %310 : vector<2x32xf32> to vector<2x32xbf16>
    %cst_99 = arith.constant dense<0.000000e+00> : vector<2x128xf32>
    %327 = tpu.matmul %326, %110, %cst_99 {dimension_numbers = #tpu.dot_dimension_numbers<[1], [0], [0], [1], [0, 0, 1, 1], [], []>} : vector<2x32xbf16>, vector<32x128xbf16>, vector<2x128xf32> -> vector<2x128xf32>
    %328 = arith.addf %325, %327 : vector<2x128xf32>
    %329 = arith.negf %328 : vector<2x128xf32>
    %330 = math.exp %329 : vector<2x128xf32>
    %cst_100 = arith.constant 1.000000e+00 : f32
    %331 = vector.broadcast %cst_100 : f32 to vector<2x128xf32>
    %332 = arith.addf %331, %330 : vector<2x128xf32>
    %333 = arith.divf %331, %332 : vector<2x128xf32>
    %334 = math.tanh %328 : vector<2x128xf32>
    %335 = vector.extract_strided_slice %333 {offsets = [0, 0], sizes = [2, 32], strides = [1, 1]} : vector<2x128xf32> to vector<2x32xf32>
    %336 = vector.extract_strided_slice %333 {offsets = [0, 32], sizes = [2, 32], strides = [1, 1]} : vector<2x128xf32> to vector<2x32xf32>
    %337 = vector.extract_strided_slice %334 {offsets = [0, 64], sizes = [2, 32], strides = [1, 1]} : vector<2x128xf32> to vector<2x32xf32>
    %338 = vector.extract_strided_slice %333 {offsets = [0, 96], sizes = [2, 32], strides = [1, 1]} : vector<2x128xf32> to vector<2x32xf32>
    %339 = arith.mulf %336, %308 : vector<2x32xf32>
    %340 = arith.mulf %335, %337 : vector<2x32xf32>
    %341 = arith.addf %339, %340 : vector<2x32xf32>
    %342 = math.tanh %341 : vector<2x32xf32>
    %343 = arith.mulf %338, %342 : vector<2x32xf32>
    %344 = vector.extract_strided_slice %343 {offsets = [0, 0], sizes = [1, 32], strides = [1, 1]} : vector<2x32xf32> to vector<1x32xf32>
    %c6_i32 = arith.constant 6 : i32
    %345 = arith.cmpi eq, %111, %c6_i32 : i32
    %346 = arith.select %345, %344, %313 : vector<1x32xf32>
    %c6_i32_101 = arith.constant 6 : i32
    %347 = arith.cmpi eq, %112, %c6_i32_101 : i32
    %348 = arith.select %347, %344, %315 : vector<1x32xf32>
    %c6_i32_102 = arith.constant 6 : i32
    %349 = arith.cmpi eq, %114, %c6_i32_102 : i32
    %350 = arith.select %349, %344, %317 : vector<1x32xf32>
    %351 = vector.extract_strided_slice %343 {offsets = [1, 0], sizes = [1, 32], strides = [1, 1]} : vector<2x32xf32> to vector<1x32xf32>
    %c6_i32_103 = arith.constant 6 : i32
    %352 = arith.cmpi eq, %115, %c6_i32_103 : i32
    %353 = arith.select %352, %351, %320 : vector<1x32xf32>
    %c6_i32_104 = arith.constant 6 : i32
    %354 = arith.cmpi eq, %116, %c6_i32_104 : i32
    %355 = arith.select %354, %351, %322 : vector<1x32xf32>
    %c6_i32_105 = arith.constant 6 : i32
    %356 = arith.cmpi eq, %118, %c6_i32_105 : i32
    %357 = arith.select %356, %351, %324 : vector<1x32xf32>
    %358 = vector.extract_strided_slice %108 {offsets = [14, 0], sizes = [2, 128], strides = [1, 1]} : vector<16x128xf32> to vector<2x128xf32>
    %359 = arith.truncf %343 : vector<2x32xf32> to vector<2x32xbf16>
    %cst_106 = arith.constant dense<0.000000e+00> : vector<2x128xf32>
    %360 = tpu.matmul %359, %110, %cst_106 {dimension_numbers = #tpu.dot_dimension_numbers<[1], [0], [0], [1], [0, 0, 1, 1], [], []>} : vector<2x32xbf16>, vector<32x128xbf16>, vector<2x128xf32> -> vector<2x128xf32>
    %361 = arith.addf %358, %360 : vector<2x128xf32>
    %362 = arith.negf %361 : vector<2x128xf32>
    %363 = math.exp %362 : vector<2x128xf32>
    %cst_107 = arith.constant 1.000000e+00 : f32
    %364 = vector.broadcast %cst_107 : f32 to vector<2x128xf32>
    %365 = arith.addf %364, %363 : vector<2x128xf32>
    %366 = arith.divf %364, %365 : vector<2x128xf32>
    %367 = math.tanh %361 : vector<2x128xf32>
    %368 = vector.extract_strided_slice %366 {offsets = [0, 0], sizes = [2, 32], strides = [1, 1]} : vector<2x128xf32> to vector<2x32xf32>
    %369 = vector.extract_strided_slice %366 {offsets = [0, 32], sizes = [2, 32], strides = [1, 1]} : vector<2x128xf32> to vector<2x32xf32>
    %370 = vector.extract_strided_slice %367 {offsets = [0, 64], sizes = [2, 32], strides = [1, 1]} : vector<2x128xf32> to vector<2x32xf32>
    %371 = vector.extract_strided_slice %366 {offsets = [0, 96], sizes = [2, 32], strides = [1, 1]} : vector<2x128xf32> to vector<2x32xf32>
    %372 = arith.mulf %369, %341 : vector<2x32xf32>
    %373 = arith.mulf %368, %370 : vector<2x32xf32>
    %374 = arith.addf %372, %373 : vector<2x32xf32>
    %375 = math.tanh %374 : vector<2x32xf32>
    %376 = arith.mulf %371, %375 : vector<2x32xf32>
    %377 = vector.extract_strided_slice %376 {offsets = [0, 0], sizes = [1, 32], strides = [1, 1]} : vector<2x32xf32> to vector<1x32xf32>
    %c7_i32 = arith.constant 7 : i32
    %378 = arith.cmpi eq, %111, %c7_i32 : i32
    %379 = arith.select %378, %377, %346 : vector<1x32xf32>
    %c7_i32_108 = arith.constant 7 : i32
    %380 = arith.cmpi eq, %112, %c7_i32_108 : i32
    %381 = arith.select %380, %377, %348 : vector<1x32xf32>
    %c7_i32_109 = arith.constant 7 : i32
    %382 = arith.cmpi eq, %114, %c7_i32_109 : i32
    %383 = arith.select %382, %377, %350 : vector<1x32xf32>
    %384 = vector.extract_strided_slice %376 {offsets = [1, 0], sizes = [1, 32], strides = [1, 1]} : vector<2x32xf32> to vector<1x32xf32>
    %c7_i32_110 = arith.constant 7 : i32
    %385 = arith.cmpi eq, %115, %c7_i32_110 : i32
    %386 = arith.select %385, %384, %353 : vector<1x32xf32>
    %c7_i32_111 = arith.constant 7 : i32
    %387 = arith.cmpi eq, %116, %c7_i32_111 : i32
    %388 = arith.select %387, %384, %355 : vector<1x32xf32>
    %c7_i32_112 = arith.constant 7 : i32
    %389 = arith.cmpi eq, %118, %c7_i32_112 : i32
    %390 = arith.select %389, %384, %357 : vector<1x32xf32>
    %c0_113 = arith.constant 0 : index
    %c0_114 = arith.constant 0 : index
    %391 = vector.load %arg9[%c0_113, %c0_114] : memref<1x2xf32, #tpu.memory_space<vmem>>, vector<1x2xf32>
    %392 = tpu.concatenate %379, %386 in 0 : vector<1x32xf32>, vector<1x32xf32> -> vector<2x32xf32>
    %c0_115 = arith.constant 0 : index
    %c0_116 = arith.constant 0 : index
    %393 = vector.load %arg8[%c0_115, %c0_116] : memref<96x2xf32, #tpu.memory_space<vmem>>, vector<32x2xf32>
    %cst_117 = arith.constant dense<0.000000e+00> : vector<2x2xf32>
    %394 = tpu.matmul %392, %393, %cst_117 {dimension_numbers = #tpu.dot_dimension_numbers<[1], [0], [0], [1], [0, 0, 1, 1], [], []>} : vector<2x32xf32>, vector<32x2xf32>, vector<2x2xf32> -> vector<2x2xf32>
    %395 = vector.broadcast %391 : vector<1x2xf32> to vector<2x2xf32>
    %396 = arith.addf %395, %394 : vector<2x2xf32>
    %397 = tpu.concatenate %381, %388 in 0 : vector<1x32xf32>, vector<1x32xf32> -> vector<2x32xf32>
    %c32 = arith.constant 32 : index
    %c0_118 = arith.constant 0 : index
    %398 = vector.load %arg8[%c32, %c0_118] : memref<96x2xf32, #tpu.memory_space<vmem>>, vector<32x2xf32>
    %cst_119 = arith.constant dense<0.000000e+00> : vector<2x2xf32>
    %399 = tpu.matmul %397, %398, %cst_119 {dimension_numbers = #tpu.dot_dimension_numbers<[1], [0], [0], [1], [0, 0, 1, 1], [], []>} : vector<2x32xf32>, vector<32x2xf32>, vector<2x2xf32> -> vector<2x2xf32>
    %400 = arith.addf %396, %399 : vector<2x2xf32>
    %401 = tpu.concatenate %383, %390 in 0 : vector<1x32xf32>, vector<1x32xf32> -> vector<2x32xf32>
    %c64 = arith.constant 64 : index
    %c0_120 = arith.constant 0 : index
    %402 = vector.load %arg8[%c64, %c0_120] : memref<96x2xf32, #tpu.memory_space<vmem>>, vector<32x2xf32>
    %cst_121 = arith.constant dense<0.000000e+00> : vector<2x2xf32>
    %403 = tpu.matmul %401, %402, %cst_121 {dimension_numbers = #tpu.dot_dimension_numbers<[1], [0], [0], [1], [0, 0, 1, 1], [], []>} : vector<2x32xf32>, vector<32x2xf32>, vector<2x2xf32> -> vector<2x2xf32>
    %404 = arith.addf %400, %403 : vector<2x2xf32>
    %c0_122 = arith.constant 0 : index
    %c0_123 = arith.constant 0 : index
    %405 = vector.load %arg10[%c0_122, %c0_123] : memref<2x2xf32, #tpu.memory_space<vmem>>, vector<2x2xf32>
    tpu.vector_store %arg10[%c0_122, %c0_123], %404 {strides = array<i32>} : memref<2x2xf32, #tpu.memory_space<vmem>>, vector<2x2xf32>,
    return
  }
  func.func @transform_0(%arg0: i32, %arg1: memref<16xi32, #tpu.memory_space<smem>>, %arg2: memref<4xi32, #tpu.memory_space<smem>>, %arg3: memref<2xi32, #tpu.memory_space<smem>>) -> (i32, i32) {
    %c0_i32 = arith.constant 0 : i32
    %c0_i32_0 = arith.constant 0 : i32
    %c0_i32_1 = arith.constant 0 : i32
    return %c0_i32, %c0_i32_0 : i32, i32
  }
  func.func @transform_1(%arg0: i32, %arg1: memref<16xi32, #tpu.memory_space<smem>>, %arg2: memref<4xi32, #tpu.memory_space<smem>>, %arg3: memref<2xi32, #tpu.memory_space<smem>>) -> (i32, i32) {
    %c0_i32 = arith.constant 0 : i32
    %c0_i32_0 = arith.constant 0 : i32
    %c0_i32_1 = arith.constant 0 : i32
    return %c0_i32, %c0_i32_0 : i32, i32
  }
  func.func @transform_2(%arg0: i32, %arg1: memref<16xi32, #tpu.memory_space<smem>>, %arg2: memref<4xi32, #tpu.memory_space<smem>>, %arg3: memref<2xi32, #tpu.memory_space<smem>>) -> (i32, i32) {
    %c0_i32 = arith.constant 0 : i32
    %c0_i32_0 = arith.constant 0 : i32
    %c0_i32_1 = arith.constant 0 : i32
    return %c0_i32, %c0_i32_0 : i32, i32
  }
  func.func @transform_3(%arg0: i32, %arg1: memref<16xi32, #tpu.memory_space<smem>>, %arg2: memref<4xi32, #tpu.memory_space<smem>>, %arg3: memref<2xi32, #tpu.memory_space<smem>>) -> (i32, i32) {
    %c0_i32 = arith.constant 0 : i32
    %c0_i32_0 = arith.constant 0 : i32
    %c0_i32_1 = arith.constant 0 : i32
    return %c0_i32, %c0_i32_0 : i32, i32
  }
  func.func @transform_4(%arg0: i32, %arg1: memref<16xi32, #tpu.memory_space<smem>>, %arg2: memref<4xi32, #tpu.memory_space<smem>>, %arg3: memref<2xi32, #tpu.memory_space<smem>>) -> (i32, i32) {
    %c0_i32 = arith.constant 0 : i32
    %c0_i32_0 = arith.constant 0 : i32
    %c0_i32_1 = arith.constant 0 : i32
    return %c0_i32, %c0_i32_0 : i32, i32
  }
  func.func @transform_5(%arg0: i32, %arg1: memref<16xi32, #tpu.memory_space<smem>>, %arg2: memref<4xi32, #tpu.memory_space<smem>>, %arg3: memref<2xi32, #tpu.memory_space<smem>>) -> (i32, i32) {
    %c0_i32 = arith.constant 0 : i32
    %c0_i32_0 = arith.constant 0 : i32
    %c0_i32_1 = arith.constant 0 : i32
    return %c0_i32, %c0_i32_0 : i32, i32
  }
  func.func @transform_6(%arg0: i32, %arg1: memref<16xi32, #tpu.memory_space<smem>>, %arg2: memref<4xi32, #tpu.memory_space<smem>>, %arg3: memref<2xi32, #tpu.memory_space<smem>>) -> (i32, i32) {
    %c0_i32 = arith.constant 0 : i32
    %c0_i32_0 = arith.constant 0 : i32
    %c0_i32_1 = arith.constant 0 : i32
    return %c0_i32, %c0_i32_0 : i32, i32
  }
}

</mosaic_0001>

<llo_original>
// kernel: tpu_custom_call.1
$region0: #{tpu_custom_call.1}
  #allocation0 [shape = 'u32[]', space=smem, size = 0x4, offset = 0x4, fixed_abs, tag = 'smem constant byte address 0x4 - core index']
  #allocation1 [shape = 'u32[144,128]{1,0:T(1,128)}', space=vmem, size = 0x12000, scoped, tag = 'internal scratch']
  #allocation2 [shape = 's32[1]{0}', space=sflag, size = 0x4, scoped, tag = 'scoped memory for tpu_custom_call.1']
  #allocation3 [shape = 'u8[512]{0}', space=smem, size = 0x200, scoped, tag = 'prefetched SMEM operand 0']
  #allocation4 [shape = 'u8[512]{0}', space=smem, size = 0x200, scoped, tag = 'prefetched SMEM operand 1']
  #allocation5 [shape = 'u8[512]{0}', space=smem, size = 0x200, scoped, tag = 'prefetched SMEM operand 2']
  %s0 = inlined_call_operand.vmem [shape: s32[16], index: 0, kind: input, shape index: {}]
  %s1 = inlined_call_operand.vmem [shape: s32[4], index: 1, kind: input, shape index: {}]
  %s2 = inlined_call_operand.vmem [shape: s32[2], index: 2, kind: input, shape index: {}]
  %s3 = inlined_call_operand.vmem [shape: f32[50,32], index: 3, kind: input, shape index: {}]
  %s4 = inlined_call_operand.vmem [shape: f32[32,128], index: 4, kind: input, shape index: {}]
  %s5 = inlined_call_operand.vmem [shape: f32[32,128], index: 5, kind: input, shape index: {}]
  %s6 = inlined_call_operand.vmem [shape: f32[1,128], index: 6, kind: input, shape index: {}]
  %s7 = inlined_call_operand.vmem [shape: f32[96,2], index: 7, kind: input, shape index: {}]
  %s8 = inlined_call_operand.vmem [shape: f32[1,2], index: 8, kind: input, shape index: {}]
  %s9 = inlined_call_operand.hbm [shape: f32[2,2], index: 9, kind: output, shape index: {}]
  %s10 = sld [smem:[#allocation0]]
  $region34: #{tpu_custom_call.1} parent=0
    _
  %s12 = ssub.s32 1, %s10
  %s13 = scalar_select 0, %s12, %s10
  %s14 = sshll.u32 %s0, 4
  %s15 = int_to_ptr.vmem [resolvable:$true] %s14
  %17 = dma.vmem_to_smem %s15, 16, [#allocation3], [#allocation2]
  %s18 = sshll.u32 %s1, 4
  %s19 = int_to_ptr.vmem [resolvable:$true] %s18
  %21 = dma.vmem_to_smem %s19, 16, [#allocation4], [#allocation2]
  %s22 = sshll.u32 %s2, 4
  %s23 = int_to_ptr.vmem [resolvable:$true] %s22
  %25 = dma.vmem_to_smem %s23, 16, [#allocation5], [#allocation2]
  %26 = dma.done [#allocation2], 48
  %27 = sfence
  $region1: #{tpu_custom_call.1} parent=0
    #allocation6 [shape = 'u8[1024]{0}', space=vmem, size = 0x400, scoped, tag = 'output window, operand 0, single buffered']
    #allocation7 [shape = 's32[1]{0}', space=sflag, size = 0x4, scoped, tag = 'scoped memory for tpu_custom_call.1']
    %28 = vsyncpa [#allocation7], 0
    // Predicated region
    $region2: #{tpu_custom_call.1} parent=1 // pred_check
      _
    $region3: #{tpu_custom_call.1} parent=1 // pred_check_branch
      %30 = sbr.rel (0) target = $region5
    $region4: #{tpu_custom_call.1} parent=1 // pred_region
      _
    $region5: #{tpu_custom_call.1} parent=1 // pred_fallthru
      _
    // Predicated region
    $region6: #{tpu_custom_call.1} parent=1 // pred_check
      _
    $region7: #{tpu_custom_call.1} parent=1 // pred_check_branch
      %32 = sbr.rel (0) target = $region9
    $region8: #{tpu_custom_call.1} parent=1 // pred_region
      _
    $region9: #{tpu_custom_call.1} parent=1 // pred_fallthru
      _
    // Predicated region
    $region10: #{tpu_custom_call.1} parent=1 // pred_check
      _
    $region11: #{tpu_custom_call.1} parent=1 // pred_check_branch
      %34 = sbr.rel (0) target = $region13
    $region12: #{tpu_custom_call.1} parent=1 // pred_region
      _
    $region13: #{tpu_custom_call.1} parent=1 // pred_fallthru
      _
    // Predicated region
    $region14: #{tpu_custom_call.1} parent=1 // pred_check
      _
    $region15: #{tpu_custom_call.1} parent=1 // pred_check_branch
      %36 = sbr.rel (0) target = $region17
    $region16: #{tpu_custom_call.1} parent=1 // pred_region
      _
    $region17: #{tpu_custom_call.1} parent=1 // pred_fallthru
      _
    // Predicated region
    $region18: #{tpu_custom_call.1} parent=1 // pred_check
      _
    $region19: #{tpu_custom_call.1} parent=1 // pred_check_branch
      %38 = sbr.rel (0) target = $region21
    $region20: #{tpu_custom_call.1} parent=1 // pred_region
      _
    $region21: #{tpu_custom_call.1} parent=1 // pred_fallthru
      _
    // Predicated region
    $region22: #{tpu_custom_call.1} parent=1 // pred_check
      _
    $region23: #{tpu_custom_call.1} parent=1 // pred_check_branch
      %40 = sbr.rel (0) target = $region25
    $region24: #{tpu_custom_call.1} parent=1 // pred_region
      _
    $region25: #{tpu_custom_call.1} parent=1 // pred_fallthru
      _
    %v42 = vlaneseq
    %v43 = vand.u32 %v42, 127
    %s44 = sld [smem:[#allocation3]]
    %v45 = vstv %s44
    %vm46 = vcmp.eq.s32.totalorder %v43, %v45
    %v47 = vsel %vm46, 1.0, 0.0
    %s48 = sld [smem:[#allocation3 + $0x8]]
    %v49 = vstv %s48
    %vm50 = vcmp.eq.s32.totalorder %v43, %v49
    %v51 = vsel %vm50, 1.0, 0.0
    %s52 = sld [smem:[#allocation3 + $0x1]]
    %v53 = vstv %s52
    %vm54 = vcmp.eq.s32.totalorder %v43, %v53
    %v55 = vsel %vm54, 1.0, 0.0
    %s56 = sld [smem:[#allocation3 + $0x9]]
    %v57 = vstv %s56
    %vm58 = vcmp.eq.s32.totalorder %v43, %v57
    %v59 = vsel %vm58, 1.0, 0.0
    %s60 = sld [smem:[#allocation3 + $0x2]]
    %v61 = vstv %s60
    %vm62 = vcmp.eq.s32.totalorder %v43, %v61
    %v63 = vsel %vm62, 1.0, 0.0
    %s64 = sld [smem:[#allocation3 + $0xa]]
    %v65 = vstv %s64
    %vm66 = vcmp.eq.s32.totalorder %v43, %v65
    %v67 = vsel %vm66, 1.0, 0.0
    %s68 = sld [smem:[#allocation3 + $0x3]]
    %v69 = vstv %s68
    %vm70 = vcmp.eq.s32.totalorder %v43, %v69
    %v71 = vsel %vm70, 1.0, 0.0
    %s72 = sld [smem:[#allocation3 + $0xb]]
    %v73 = vstv %s72
    %vm74 = vcmp.eq.s32.totalorder %v43, %v73
    %v75 = vsel %vm74, 1.0, 0.0
    %s76 = sld [smem:[#allocation3 + $0x4]]
    %v77 = vstv %s76
    %vm78 = vcmp.eq.s32.totalorder %v43, %v77
    %v79 = vsel %vm78, 1.0, 0.0
    %s80 = sld [smem:[#allocation3 + $0xc]]
    %v81 = vstv %s80
    %vm82 = vcmp.eq.s32.totalorder %v43, %v81
    %v83 = vsel %vm82, 1.0, 0.0
    %s84 = sld [smem:[#allocation3 + $0x5]]
    %v85 = vstv %s84
    %vm86 = vcmp.eq.s32.totalorder %v43, %v85
    %v87 = vsel %vm86, 1.0, 0.0
    %s88 = sld [smem:[#allocation3 + $0xd]]
    %v89 = vstv %s88
    %vm90 = vcmp.eq.s32.totalorder %v43, %v89
    %v91 = vsel %vm90, 1.0, 0.0
    %s92 = sld [smem:[#allocation3 + $0x6]]
    %v93 = vstv %s92
    %vm94 = vcmp.eq.s32.totalorder %v43, %v93
    %v95 = vsel %vm94, 1.0, 0.0
    %s96 = sld [smem:[#allocation3 + $0xe]]
    %v97 = vstv %s96
    %vm98 = vcmp.eq.s32.totalorder %v43, %v97
    %v99 = vsel %vm98, 1.0, 0.0
    %s100 = sld [smem:[#allocation3 + $0x7]]
    %v101 = vstv %s100
    %vm102 = vcmp.eq.s32.totalorder %v43, %v101
    %v103 = vsel %vm102, 1.0, 0.0
    %s104 = sld [smem:[#allocation3 + $0xf]]
    %v105 = vstv %s104
    %vm106 = vcmp.eq.s32.totalorder %v43, %v105
    %v107 = vsel %vm106, 1.0, 0.0
    %vm108 = vcmask 1040384
    %v109 = vsel %vm108, %v47, %v51
    %vm110 = vcmask 1041408
    %v111 = vsel %vm110, %v109, %v55
    %vm112 = vcmask 1042432
    %v113 = vsel %vm112, %v111, %v59
    %vm114 = vcmask 1043456
    %v115 = vsel %vm114, %v113, %v63
    %vm116 = vcmask 1044480
    %v117 = vsel %vm116, %v115, %v67
    %vm118 = vcmask 1045504
    %v119 = vsel %vm118, %v117, %v71
    %vm120 = vcmask 1046528
    %v121 = vsel %vm120, %v119, %v75
    %v122 = vsel %vm108, %v79, %v83
    %v123 = vsel %vm110, %v122, %v87
    %v124 = vsel %vm112, %v123, %v91
    %v125 = vsel %vm114, %v124, %v95
    %v126 = vsel %vm116, %v125, %v99
    %v127 = vsel %vm118, %v126, %v103
    %v128 = vsel %vm120, %v127, %v107
    %v129 = vpack.c.bf16 %v128, %v121
    %v130 = vld [vmem:[%s3] sm:$0xff]
    %v131 = vld [vmem:[%s3 + $0x8] sm:$0xff]
    %v132 = vld [vmem:[%s3 + $0x10] sm:$0xff]
    %v133 = vld [vmem:[%s3 + $0x18] sm:$0xff]
    %v134 = vld [vmem:[%s3 + $0x20] sm:$0xff]
    %v135 = vld [vmem:[%s3 + $0x28] sm:$0xff]
    %v136 = vld [vmem:[%s3 + $0x30] sm:$0x3]
    %v137 = vpack.c.bf16 %v131, %v130
    %v138 = vpack.c.bf16 %v133, %v132
    %v139 = vpack.c.bf16 %v135, %v134
    %v140 = vpack.c.bf16 %v136, %v136
    %vm141 = vcmask 408576
    %v143 = vsel %vm141, %v129, 0
    %v146 = vsel %vm108, %v140, 0
    %148 = vmatprep.subr.bf16.mxu0 0
    %149 = vmatpush1.bf16.msra.mxu0 %v137
    %150 = vmatprep.subr.bf16.mxu0 0
    %151 = vmatpush1.bf16.msra.mxu0 %v138
    %152 = vmatprep.subr.bf16.mxu0 0
    %153 = vmatpush1.bf16.msra.mxu0 %v139
    %154 = vmatprep.subr.bf16.mxu0 0
    %155 = vmatpush1.bf16.msra.mxu0 %v146
    %156 = vmatprep.subr.bf16.mxu0 0
    %157 = vmatpush1.bf16.msra.mxu0 0
    %158 = vmatprep.subr.bf16.mxu0 0
    %159 = vmatpush1.bf16.msra.mxu0 0
    %160 = vmatprep.subr.bf16.mxu0 0
    %161 = vmatpush1.bf16.msra.mxu0 0
    %162 = vmatprep.subr.bf16.mxu0 0
    %163 = vmatpush1.bf16.msra.mxu0 0
    %164 = vmatprep.subr.bf16.mxu0 0
    %165 = vmatpush1.bf16.msra.mxu0 0
    %166 = vmatprep.subr.bf16.mxu0 0
    %167 = vmatpush1.bf16.msra.mxu0 0
    %168 = vmatprep.subr.bf16.mxu0 0
    %169 = vmatpush1.bf16.msra.mxu0 0
    %170 = vmatprep.subr.bf16.mxu0 0
    %171 = vmatpush1.bf16.msra.mxu0 0
    %172 = vmatprep.subr.bf16.mxu0 0
    %173 = vmatpush1.bf16.msra.mxu0 0
    %174 = vmatprep.subr.bf16.mxu0 0
    %175 = vmatpush1.bf16.msra.mxu0 0
    %176 = vmatprep.subr.bf16.mxu0 0
    %177 = vmatpush1.bf16.msra.mxu0 0
    %178 = vmatprep.subr.bf16.mxu0 0
    %179 = vmatpush1.bf16.msra.mxu0 0
    %180 = vmatprep.mubr.bf16.mxu0 0
    %181 = vmatmul.mubr.bf16.gmra.mrb[0].mxu0 %v143
    %v182 = vpop.f32.mrb[0].mxu0
    %v183 = vadd.f32 0.0, %v182
    %v184 = vpop.f32.mrb[0].mxu0
    %v185 = vpop.f32.mrb[0].mxu0
    %v186 = vadd.f32 0.0, %v185
    %v187 = vpop.f32.mrb[0].mxu0
    %188 = vdwg.mxu0
    %v189 = vpack.c.bf16 %v186, %v183
    %v190 = vld [vmem:[%s4] sm:$0xff]
    %v191 = vld [vmem:[%s4 + $0x8] sm:$0xff]
    %v192 = vld [vmem:[%s4 + $0x10] sm:$0xff]
    %v193 = vld [vmem:[%s4 + $0x18] sm:$0xff]
    %v194 = vpack.c.bf16 %v191, %v190
    %v195 = vpack.c.bf16 %v193, %v192
    %v196 = vld [vmem:[%s6] sm:$0x1]
    %v198 = vlaneseq
    %v199 = vshrl.u32 %v198, 7
    %v200 = vsub.s32 0, %v199
    %v201 = vrot.slane %v196, %v200
    %vm203 = vcmask 261120
    %v205 = vsel %vm203, %v189, 0
    %207 = vmatprep.subr.bf16.mxu0 0
    %208 = vmatpush1.bf16.msra.mxu0 %v194
    %209 = vmatprep.subr.bf16.mxu0 0
    %210 = vmatpush1.bf16.msra.mxu0 %v195
    %211 = vmatprep.subr.bf16.mxu0 0
    %212 = vmatpush1.bf16.msra.mxu0 0
    %213 = vmatprep.subr.bf16.mxu0 0
    %214 = vmatpush1.bf16.msra.mxu0 0
    %215 = vmatprep.subr.bf16.mxu0 0
    %216 = vmatpush1.bf16.msra.mxu0 0
    %217 = vmatprep.subr.bf16.mxu0 0
    %218 = vmatpush1.bf16.msra.mxu0 0
    %219 = vmatprep.subr.bf16.mxu0 0
    %220 = vmatpush1.bf16.msra.mxu0 0
    %221 = vmatprep.subr.bf16.mxu0 0
    %222 = vmatpush1.bf16.msra.mxu0 0
    %223 = vmatprep.subr.bf16.mxu0 0
    %224 = vmatpush1.bf16.msra.mxu0 0
    %225 = vmatprep.subr.bf16.mxu0 0
    %226 = vmatpush1.bf16.msra.mxu0 0
    %227 = vmatprep.subr.bf16.mxu0 0
    %228 = vmatpush1.bf16.msra.mxu0 0
    %229 = vmatprep.subr.bf16.mxu0 0
    %230 = vmatpush1.bf16.msra.mxu0 0
    %231 = vmatprep.subr.bf16.mxu0 0
    %232 = vmatpush1.bf16.msra.mxu0 0
    %233 = vmatprep.subr.bf16.mxu0 0
    %234 = vmatpush1.bf16.msra.mxu0 0
    %235 = vmatprep.subr.bf16.mxu0 0
    %236 = vmatpush1.bf16.msra.mxu0 0
    %237 = vmatprep.subr.bf16.mxu0 0
    %238 = vmatpush1.bf16.msra.mxu0 0
    %239 = vmatprep.mubr.bf16.mxu0 0
    %240 = vmatmul.mubr.bf16.gmra.mrb[0].mxu0 %v205
    %v241 = vpop.f32.mrb[0].mxu0
    %v242 = vadd.f32 %v201, %v241
    %v243 = vpop.f32.mrb[0].mxu0
    %v244 = vpop.f32.mrb[0].mxu0
    %v245 = vadd.f32 %v201, %v244
    %v246 = vpop.f32.mrb[0].mxu0
    %247 = vdwg.mxu0
    %v248 = vld [vmem:[%s5] sm:$0xff]
    %v249 = vld [vmem:[%s5 + $0x8] sm:$0xff]
    %v250 = vld [vmem:[%s5 + $0x10] sm:$0xff]
    %v251 = vld [vmem:[%s5 + $0x18] sm:$0xff]
    %v252 = vpack.c.bf16 %v249, %v248
    %v253 = vpack.c.bf16 %v251, %v250
    %s254 = sld [smem:[#allocation4]]
    %s255 = sld [smem:[#allocation4 + $0x1]]
    %s256 = sld [smem:[#allocation5]]
    %s257 = ssub.s32 %s256, 1
    %s258 = sld [smem:[#allocation4 + $0x2]]
    %s259 = sld [smem:[#allocation4 + $0x3]]
    %s260 = sld [smem:[#allocation5 + $0x1]]
    %s261 = ssub.s32 %s260, 1
    %v263 = vsel %vm203, 0, 0
    %265 = vmatprep.subr.bf16.mxu0 0
    %266 = vmatpush1.bf16.msra.mxu0 %v252
    %267 = vmatprep.subr.bf16.mxu0 0
    %268 = vmatpush1.bf16.msra.mxu0 %v253
    %269 = vmatprep.subr.bf16.mxu0 0
    %270 = vmatpush1.bf16.msra.mxu0 0
    %271 = vmatprep.subr.bf16.mxu0 0
    %272 = vmatpush1.bf16.msra.mxu0 0
    %273 = vmatprep.subr.bf16.mxu0 0
    %274 = vmatpush1.bf16.msra.mxu0 0
    %275 = vmatprep.subr.bf16.mxu0 0
    %276 = vmatpush1.bf16.msra.mxu0 0
    %277 = vmatprep.subr.bf16.mxu0 0
    %278 = vmatpush1.bf16.msra.mxu0 0
    %279 = vmatprep.subr.bf16.mxu0 0
    %280 = vmatpush1.bf16.msra.mxu0 0
    %281 = vmatprep.subr.bf16.mxu0 0
    %282 = vmatpush1.bf16.msra.mxu0 0
    %283 = vmatprep.subr.bf16.mxu0 0
    %284 = vmatpush1.bf16.msra.mxu0 0
    %285 = vmatprep.subr.bf16.mxu0 0
    %286 = vmatpush1.bf16.msra.mxu0 0
    %287 = vmatprep.subr.bf16.mxu0 0
    %288 = vmatpush1.bf16.msra.mxu0 0
    %289 = vmatprep.subr.bf16.mxu0 0
    %290 = vmatpush1.bf16.msra.mxu0 0
    %291 = vmatprep.subr.bf16.mxu0 0
    %292 = vmatpush1.bf16.msra.mxu0 0
    %293 = vmatprep.subr.bf16.mxu0 0
    %294 = vmatpush1.bf16.msra.mxu0 0
    %295 = vmatprep.subr.bf16.mxu0 0
    %296 = vmatpush1.bf16.msra.mxu0 0
    %297 = vmatprep.mubr.bf16.mxu0 0
    %298 = vmatmul.mubr.bf16.gmra.mrb[0].mxu0 %v263
    %v299 = vpop.f32.mrb[0].mxu0
    %v300 = vadd.f32 0.0, %v299
    %v301 = vpop.f32.mrb[0].mxu0
    %v302 = vpop.f32.mrb[0].mxu0
    %v303 = vpop.f32.mrb[0].mxu0
    %304 = vdwg.mxu0
    %v305 = vadd.f32 %v242, %v300
    %v306 = vxor.u32 %v305, 2147483648
    %v307 = vmul.f32 %v306, 1.442695
    %v308 = vpow.pop %v307
    %v309 = vadd.f32 %v308, 1.0
    %v310 = vrcp.pop %v309
    %v311 = vmul.f32 1.0, %v310
    %v312 = vtanh.pop %v305
    %v313 = vmul.f32 %v311, 0.0
    %315 = vrot.lane.b32.xlu0 %v312, 64
    %v316 = vpop.permute.xlu0 %315
    %v318 = vmul.f32 %v311, %v316
    %320 = vrot.lane.b32.xlu0 %v318, 32
    %v321 = vpop.permute.xlu0 %320
    %v323 = vadd.f32 %v313, %v321
    %v324 = vtanh.pop %v323
    %326 = vrot.lane.b32.xlu0 %v324, 64
    %v327 = vpop.permute.xlu0 %326
    %v329 = vmul.f32 %v311, %v327
    %p330 = scmp.eq.s32.totalorder %s254, 0
    %s331 = scalar_select %p330, 1, 0
    %v332 = vstv %s331
    %vm333 = vcmp.eq.s32.totalorder %v332, 1
    %v334 = vsel %vm333, %v329, 0.0
    %p335 = scmp.eq.s32.totalorder %s255, 0
    %s336 = scalar_select %p335, 1, 0
    %v337 = vstv %s336
    %vm338 = vcmp.eq.s32.totalorder %v337, 1
    %v339 = vsel %vm338, %v329, 0.0
    %p340 = scmp.eq.s32.totalorder %s257, 0
    %s341 = scalar_select %p340, 1, 0
    %v342 = vstv %s341
    %vm343 = vcmp.eq.s32.totalorder %v342, 1
    %v344 = vsel %vm343, %v329, 0.0
    %p345 = scmp.eq.s32.totalorder %s258, 0
    %s346 = scalar_select %p345, 1, 0
    %v347 = vstv %s346
    %vm348 = vcmp.eq.s32.totalorder %v347, 1
    %v349 = vsel %vm348, %v329, 0.0
    %p350 = scmp.eq.s32.totalorder %s259, 0
    %s351 = scalar_select %p350, 1, 0
    %v352 = vstv %s351
    %vm353 = vcmp.eq.s32.totalorder %v352, 1
    %v354 = vsel %vm353, %v329, 0.0
    %p355 = scmp.eq.s32.totalorder %s261, 0
    %s356 = scalar_select %p355, 1, 0
    %v357 = vstv %s356
    %vm358 = vcmp.eq.s32.totalorder %v357, 1
    %v359 = vsel %vm358, %v329, 0.0
    %v360 = vpack.c.bf16 %v329, %v329
    %362 = vrot.lane.b32.xlu0 %v360, 32
    %v363 = vpop.permute.xlu0 %362
    %v365 = vsel %vm203, %v363, 0
    %367 = vmatprep.subr.bf16.mxu0 0
    %368 = vmatpush1.bf16.msra.mxu0 %v252
    %369 = vmatprep.subr.bf16.mxu0 0
    %370 = vmatpush1.bf16.msra.mxu0 %v253
    %371 = vmatprep.subr.bf16.mxu0 0
    %372 = vmatpush1.bf16.msra.mxu0 0
    %373 = vmatprep.subr.bf16.mxu0 0
    %374 = vmatpush1.bf16.msra.mxu0 0
    %375 = vmatprep.subr.bf16.mxu0 0
    %376 = vmatpush1.bf16.msra.mxu0 0
    %377 = vmatprep.subr.bf16.mxu0 0
    %378 = vmatpush1.bf16.msra.mxu0 0
    %379 = vmatprep.subr.bf16.mxu0 0
    %380 = vmatpush1.bf16.msra.mxu0 0
    %381 = vmatprep.subr.bf16.mxu0 0
    %382 = vmatpush1.bf16.msra.mxu0 0
    %383 = vmatprep.subr.bf16.mxu0 0
    %384 = vmatpush1.bf16.msra.mxu0 0
    %385 = vmatprep.subr.bf16.mxu0 0
    %386 = vmatpush1.bf16.msra.mxu0 0
    %387 = vmatprep.subr.bf16.mxu0 0
    %388 = vmatpush1.bf16.msra.mxu0 0
    %389 = vmatprep.subr.bf16.mxu0 0
    %390 = vmatpush1.bf16.msra.mxu0 0
    %391 = vmatprep.subr.bf16.mxu0 0
    %392 = vmatpush1.bf16.msra.mxu0 0
    %393 = vmatprep.subr.bf16.mxu0 0
    %394 = vmatpush1.bf16.msra.mxu0 0
    %395 = vmatprep.subr.bf16.mxu0 0
    %396 = vmatpush1.bf16.msra.mxu0 0
    %397 = vmatprep.subr.bf16.mxu0 0
    %398 = vmatpush1.bf16.msra.mxu0 0
    %399 = vmatprep.mubr.bf16.mxu0 0
    %400 = vmatmul.mubr.bf16.gmra.mrb[0].mxu0 %v365
    %v401 = vpop.f32.mrb[0].mxu0
    %v402 = vadd.f32 0.0, %v401
    %v403 = vpop.f32.mrb[0].mxu0
    %v404 = vpop.f32.mrb[0].mxu0
    %v405 = vpop.f32.mrb[0].mxu0
    %406 = vdwg.mxu0
    %v408 = vrot.slane %v402, 6
    %v410 = vadd.f32 %v242, %v408
    %v411 = vxor.u32 %v410, 2147483648
    %v412 = vmul.f32 %v411, 1.442695
    %v413 = vpow.pop %v412
    %v414 = vadd.f32 %v413, 1.0
    %v415 = vrcp.pop %v414
    %v416 = vmul.f32 1.0, %v415
    %v417 = vtanh.pop %v410
    %v419 = vrot.slane %v323, 6
    %v421 = vmul.f32 %v416, %v419
    %423 = vrot.lane.b32.xlu0 %v417, 64
    %v424 = vpop.permute.xlu0 %423
    %v426 = vmul.f32 %v416, %v424
    %428 = vrot.lane.b32.xlu0 %v426, 32
    %v429 = vpop.permute.xlu0 %428
    %v431 = vadd.f32 %v421, %v429
    %v432 = vtanh.pop %v431
    %434 = vrot.lane.b32.xlu0 %v432, 64
    %v435 = vpop.permute.xlu0 %434
    %v437 = vmul.f32 %v416, %v435
    %p438 = scmp.eq.s32.totalorder %s254, 1
    %s439 = scalar_select %p438, 1, 0
    %v440 = vstv %s439
    %vm441 = vcmp.eq.s32.totalorder %v440, 1
    %v443 = vrot.slane %v334, 6
    %v445 = vsel %vm441, %v437, %v443
    %p446 = scmp.eq.s32.totalorder %s255, 1
    %s447 = scalar_select %p446, 1, 0
    %v448 = vstv %s447
    %vm449 = vcmp.eq.s32.totalorder %v448, 1
    %v451 = vrot.slane %v339, 6
    %v453 = vsel %vm449, %v437, %v451
    %p454 = scmp.eq.s32.totalorder %s257, 1
    %s455 = scalar_select %p454, 1, 0
    %v456 = vstv %s455
    %vm457 = vcmp.eq.s32.totalorder %v456, 1
    %v459 = vrot.slane %v344, 6
    %v461 = vsel %vm457, %v437, %v459
    %p462 = scmp.eq.s32.totalorder %s258, 1
    %s463 = scalar_select %p462, 1, 0
    %v464 = vstv %s463
    %vm465 = vcmp.eq.s32.totalorder %v464, 1
    %v467 = vrot.slane %v349, 6
    %v469 = vsel %vm465, %v437, %v467
    %p470 = scmp.eq.s32.totalorder %s259, 1
    %s471 = scalar_select %p470, 1, 0
    %v472 = vstv %s471
    %vm473 = vcmp.eq.s32.totalorder %v472, 1
    %v475 = vrot.slane %v354, 6
    %v477 = vsel %vm473, %v437, %v475
    %p478 = scmp.eq.s32.totalorder %s261, 1
    %s479 = scalar_select %p478, 1, 0
    %v480 = vstv %s479
    %vm481 = vcmp.eq.s32.totalorder %v480, 1
    %v483 = vrot.slane %v359, 6
    %v485 = vsel %vm481, %v437, %v483
    %v486 = vpack.c.bf16 %v437, %v437
    %v488 = vrot.slane %v486, 1
    %489 = vrot.lane.b32.xlu0 %v488, 32
    %v490 = vpop.permute.xlu0 %489
    %v492 = vsel %vm203, %v490, 0
    %494 = vmatprep.subr.bf16.mxu0 0
    %495 = vmatpush1.bf16.msra.mxu0 %v252
    %496 = vmatprep.subr.bf16.mxu0 0
    %497 = vmatpush1.bf16.msra.mxu0 %v253
    %498 = vmatprep.subr.bf16.mxu0 0
    %499 = vmatpush1.bf16.msra.mxu0 0
    %500 = vmatprep.subr.bf16.mxu0 0
    %501 = vmatpush1.bf16.msra.mxu0 0
    %502 = vmatprep.subr.bf16.mxu0 0
    %503 = vmatpush1.bf16.msra.mxu0 0
    %504 = vmatprep.subr.bf16.mxu0 0
    %505 = vmatpush1.bf16.msra.mxu0 0
    %506 = vmatprep.subr.bf16.mxu0 0
    %507 = vmatpush1.bf16.msra.mxu0 0
    %508 = vmatprep.subr.bf16.mxu0 0
    %509 = vmatpush1.bf16.msra.mxu0 0
    %510 = vmatprep.subr.bf16.mxu0 0
    %511 = vmatpush1.bf16.msra.mxu0 0
    %512 = vmatprep.subr.bf16.mxu0 0
    %513 = vmatpush1.bf16.msra.mxu0 0
    %514 = vmatprep.subr.bf16.mxu0 0
    %515 = vmatpush1.bf16.msra.mxu0 0
    %516 = vmatprep.subr.bf16.mxu0 0
    %517 = vmatpush1.bf16.msra.mxu0 0
    %518 = vmatprep.subr.bf16.mxu0 0
    %519 = vmatpush1.bf16.msra.mxu0 0
    %520 = vmatprep.subr.bf16.mxu0 0
    %521 = vmatpush1.bf16.msra.mxu0 0
    %522 = vmatprep.subr.bf16.mxu0 0
    %523 = vmatpush1.bf16.msra.mxu0 0
    %524 = vmatprep.subr.bf16.mxu0 0
    %525 = vmatpush1.bf16.msra.mxu0 0
    %526 = vmatprep.mubr.bf16.mxu0 0
    %527 = vmatmul.mubr.bf16.gmra.mrb[0].mxu0 %v492
    %v528 = vpop.f32.mrb[0].mxu0
    %v529 = vadd.f32 0.0, %v528
    %v530 = vpop.f32.mrb[0].mxu0
    %v531 = vpop.f32.mrb[0].mxu0
    %v532 = vpop.f32.mrb[0].mxu0
    %533 = vdwg.mxu0
    %v535 = vrot.slane %v529, 4
    %v537 = vadd.f32 %v242, %v535
    %v538 = vxor.u32 %v537, 2147483648
    %v539 = vmul.f32 %v538, 1.442695
    %v540 = vpow.pop %v539
    %v541 = vadd.f32 %v540, 1.0
    %v542 = vrcp.pop %v541
    %v543 = vmul.f32 1.0, %v542
    %v544 = vtanh.pop %v537
    %v546 = vrot.slane %v431, 6
    %v548 = vmul.f32 %v543, %v546
    %550 = vrot.lane.b32.xlu0 %v544, 64
    %v551 = vpop.permute.xlu0 %550
    %v553 = vmul.f32 %v543, %v551
    %555 = vrot.lane.b32.xlu0 %v553, 32
    %v556 = vpop.permute.xlu0 %555
    %v558 = vadd.f32 %v548, %v556
    %v559 = vtanh.pop %v558
    %561 = vrot.lane.b32.xlu0 %v559, 64
    %v562 = vpop.permute.xlu0 %561
    %v564 = vmul.f32 %v543, %v562
    %p565 = scmp.eq.s32.totalorder %s254, 2
    %s566 = scalar_select %p565, 1, 0
    %v567 = vstv %s566
    %vm568 = vcmp.eq.s32.totalorder %v567, 1
    %v570 = vrot.slane %v445, 6
    %v572 = vsel %vm568, %v564, %v570
    %p573 = scmp.eq.s32.totalorder %s255, 2
    %s574 = scalar_select %p573, 1, 0
    %v575 = vstv %s574
    %vm576 = vcmp.eq.s32.totalorder %v575, 1
    %v578 = vrot.slane %v453, 6
    %v580 = vsel %vm576, %v564, %v578
    %p581 = scmp.eq.s32.totalorder %s257, 2
    %s582 = scalar_select %p581, 1, 0
    %v583 = vstv %s582
    %vm584 = vcmp.eq.s32.totalorder %v583, 1
    %v586 = vrot.slane %v461, 6
    %v588 = vsel %vm584, %v564, %v586
    %p589 = scmp.eq.s32.totalorder %s258, 2
    %s590 = scalar_select %p589, 1, 0
    %v591 = vstv %s590
    %vm592 = vcmp.eq.s32.totalorder %v591, 1
    %v594 = vrot.slane %v469, 6
    %v596 = vsel %vm592, %v564, %v594
    %p597 = scmp.eq.s32.totalorder %s259, 2
    %s598 = scalar_select %p597, 1, 0
    %v599 = vstv %s598
    %vm600 = vcmp.eq.s32.totalorder %v599, 1
    %v602 = vrot.slane %v477, 6
    %v604 = vsel %vm600, %v564, %v602
    %p605 = scmp.eq.s32.totalorder %s261, 2
    %s606 = scalar_select %p605, 1, 0
    %v607 = vstv %s606
    %vm608 = vcmp.eq.s32.totalorder %v607, 1
    %v610 = vrot.slane %v485, 6
    %v612 = vsel %vm608, %v564, %v610
    %v613 = vpack.c.bf16 %v564, %v564
    %v615 = vrot.slane %v613, 2
    %616 = vrot.lane.b32.xlu0 %v615, 32
    %v617 = vpop.permute.xlu0 %616
    %v619 = vsel %vm203, %v617, 0
    %621 = vmatprep.subr.bf16.mxu0 0
    %622 = vmatpush1.bf16.msra.mxu0 %v252
    %623 = vmatprep.subr.bf16.mxu0 0
    %624 = vmatpush1.bf16.msra.mxu0 %v253
    %625 = vmatprep.subr.bf16.mxu0 0
    %626 = vmatpush1.bf16.msra.mxu0 0
    %627 = vmatprep.subr.bf16.mxu0 0
    %628 = vmatpush1.bf16.msra.mxu0 0
    %629 = vmatprep.subr.bf16.mxu0 0
    %630 = vmatpush1.bf16.msra.mxu0 0
    %631 = vmatprep.subr.bf16.mxu0 0
    %632 = vmatpush1.bf16.msra.mxu0 0
    %633 = vmatprep.subr.bf16.mxu0 0
    %634 = vmatpush1.bf16.msra.mxu0 0
    %635 = vmatprep.subr.bf16.mxu0 0
    %636 = vmatpush1.bf16.msra.mxu0 0
    %637 = vmatprep.subr.bf16.mxu0 0
    %638 = vmatpush1.bf16.msra.mxu0 0
    %639 = vmatprep.subr.bf16.mxu0 0
    %640 = vmatpush1.bf16.msra.mxu0 0
    %641 = vmatprep.subr.bf16.mxu0 0
    %642 = vmatpush1.bf16.msra.mxu0 0
    %643 = vmatprep.subr.bf16.mxu0 0
    %644 = vmatpush1.bf16.msra.mxu0 0
    %645 = vmatprep.subr.bf16.mxu0 0
    %646 = vmatpush1.bf16.msra.mxu0 0
    %647 = vmatprep.subr.bf16.mxu0 0
    %648 = vmatpush1.bf16.msra.mxu0 0
    %649 = vmatprep.subr.bf16.mxu0 0
    %650 = vmatpush1.bf16.msra.mxu0 0
    %651 = vmatprep.subr.bf16.mxu0 0
    %652 = vmatpush1.bf16.msra.mxu0 0
    %653 = vmatprep.mubr.bf16.mxu0 0
    %654 = vmatmul.mubr.bf16.gmra.mrb[0].mxu0 %v619
    %v655 = vpop.f32.mrb[0].mxu0
    %v656 = vadd.f32 0.0, %v655
    %v657 = vpop.f32.mrb[0].mxu0
    %v658 = vpop.f32.mrb[0].mxu0
    %v659 = vpop.f32.mrb[0].mxu0
    %660 = vdwg.mxu0
    %v662 = vrot.slane %v656, 2
    %v664 = vadd.f32 %v242, %v662
    %v665 = vxor.u32 %v664, 2147483648
    %v666 = vmul.f32 %v665, 1.442695
    %v667 = vpow.pop %v666
    %v668 = vadd.f32 %v667, 1.0
    %v669 = vrcp.pop %v668
    %v670 = vmul.f32 1.0, %v669
    %v671 = vtanh.pop %v664
    %v673 = vrot.slane %v558, 6
    %v675 = vmul.f32 %v670, %v673
    %677 = vrot.lane.b32.xlu0 %v671, 64
    %v678 = vpop.permute.xlu0 %677
    %v680 = vmul.f32 %v670, %v678
    %682 = vrot.lane.b32.xlu0 %v680, 32
    %v683 = vpop.permute.xlu0 %682
    %v685 = vadd.f32 %v675, %v683
    %v686 = vtanh.pop %v685
    %688 = vrot.lane.b32.xlu0 %v686, 64
    %v689 = vpop.permute.xlu0 %688
    %v691 = vmul.f32 %v670, %v689
    %p692 = scmp.eq.s32.totalorder %s254, 3
    %s693 = scalar_select %p692, 1, 0
    %v694 = vstv %s693
    %vm695 = vcmp.eq.s32.totalorder %v694, 1
    %v697 = vrot.slane %v572, 6
    %v699 = vsel %vm695, %v691, %v697
    %p700 = scmp.eq.s32.totalorder %s255, 3
    %s701 = scalar_select %p700, 1, 0
    %v702 = vstv %s701
    %vm703 = vcmp.eq.s32.totalorder %v702, 1
    %v705 = vrot.slane %v580, 6
    %v707 = vsel %vm703, %v691, %v705
    %p708 = scmp.eq.s32.totalorder %s257, 3
    %s709 = scalar_select %p708, 1, 0
    %v710 = vstv %s709
    %vm711 = vcmp.eq.s32.totalorder %v710, 1
    %v713 = vrot.slane %v588, 6
    %v715 = vsel %vm711, %v691, %v713
    %p716 = scmp.eq.s32.totalorder %s258, 3
    %s717 = scalar_select %p716, 1, 0
    %v718 = vstv %s717
    %vm719 = vcmp.eq.s32.totalorder %v718, 1
    %v721 = vrot.slane %v596, 6
    %v723 = vsel %vm719, %v691, %v721
    %p724 = scmp.eq.s32.totalorder %s259, 3
    %s725 = scalar_select %p724, 1, 0
    %v726 = vstv %s725
    %vm727 = vcmp.eq.s32.totalorder %v726, 1
    %v729 = vrot.slane %v604, 6
    %v731 = vsel %vm727, %v691, %v729
    %p732 = scmp.eq.s32.totalorder %s261, 3
    %s733 = scalar_select %p732, 1, 0
    %v734 = vstv %s733
    %vm735 = vcmp.eq.s32.totalorder %v734, 1
    %v737 = vrot.slane %v612, 6
    %v739 = vsel %vm735, %v691, %v737
    %v740 = vpack.c.bf16 %v691, %v691
    %v742 = vrot.slane %v740, 3
    %743 = vrot.lane.b32.xlu0 %v742, 32
    %v744 = vpop.permute.xlu0 %743
    %v746 = vsel %vm203, %v744, 0
    %748 = vmatprep.subr.bf16.mxu0 0
    %749 = vmatpush1.bf16.msra.mxu0 %v252
    %750 = vmatprep.subr.bf16.mxu0 0
    %751 = vmatpush1.bf16.msra.mxu0 %v253
    %752 = vmatprep.subr.bf16.mxu0 0
    %753 = vmatpush1.bf16.msra.mxu0 0
    %754 = vmatprep.subr.bf16.mxu0 0
    %755 = vmatpush1.bf16.msra.mxu0 0
    %756 = vmatprep.subr.bf16.mxu0 0
    %757 = vmatpush1.bf16.msra.mxu0 0
    %758 = vmatprep.subr.bf16.mxu0 0
    %759 = vmatpush1.bf16.msra.mxu0 0
    %760 = vmatprep.subr.bf16.mxu0 0
    %761 = vmatpush1.bf16.msra.mxu0 0
    %762 = vmatprep.subr.bf16.mxu0 0
    %763 = vmatpush1.bf16.msra.mxu0 0
    %764 = vmatprep.subr.bf16.mxu0 0
    %765 = vmatpush1.bf16.msra.mxu0 0
    %766 = vmatprep.subr.bf16.mxu0 0
    %767 = vmatpush1.bf16.msra.mxu0 0
    %768 = vmatprep.subr.bf16.mxu0 0
    %769 = vmatpush1.bf16.msra.mxu0 0
    %770 = vmatprep.subr.bf16.mxu0 0
    %771 = vmatpush1.bf16.msra.mxu0 0
    %772 = vmatprep.subr.bf16.mxu0 0
    %773 = vmatpush1.bf16.msra.mxu0 0
    %774 = vmatprep.subr.bf16.mxu0 0
    %775 = vmatpush1.bf16.msra.mxu0 0
    %776 = vmatprep.subr.bf16.mxu0 0
    %777 = vmatpush1.bf16.msra.mxu0 0
    %778 = vmatprep.subr.bf16.mxu0 0
    %779 = vmatpush1.bf16.msra.mxu0 0
    %780 = vmatprep.mubr.bf16.mxu0 0
    %781 = vmatmul.mubr.bf16.gmra.mrb[0].mxu0 %v746
    %v782 = vpop.f32.mrb[0].mxu0
    %v783 = vadd.f32 0.0, %v782
    %v784 = vpop.f32.mrb[0].mxu0
    %v785 = vpop.f32.mrb[0].mxu0
    %v786 = vpop.f32.mrb[0].mxu0
    %787 = vdwg.mxu0
    %v788 = vadd.f32 %v245, %v783
    %v789 = vxor.u32 %v788, 2147483648
    %v790 = vmul.f32 %v789, 1.442695
    %v791 = vpow.pop %v790
    %v792 = vadd.f32 %v791, 1.0
    %v793 = vrcp.pop %v792
    %v794 = vmul.f32 1.0, %v793
    %v795 = vtanh.pop %v788
    %v797 = vrot.slane %v685, 6
    %v799 = vmul.f32 %v794, %v797
    %801 = vrot.lane.b32.xlu0 %v795, 64
    %v802 = vpop.permute.xlu0 %801
    %v804 = vmul.f32 %v794, %v802
    %806 = vrot.lane.b32.xlu0 %v804, 32
    %v807 = vpop.permute.xlu0 %806
    %v809 = vadd.f32 %v799, %v807
    %v810 = vtanh.pop %v809
    %812 = vrot.lane.b32.xlu0 %v810, 64
    %v813 = vpop.permute.xlu0 %812
    %v815 = vmul.f32 %v794, %v813
    %p816 = scmp.eq.s32.totalorder %s254, 4
    %s817 = scalar_select %p816, 1, 0
    %v818 = vstv %s817
    %vm819 = vcmp.eq.s32.totalorder %v818, 1
    %v821 = vrot.slane %v699, 6
    %v823 = vsel %vm819, %v815, %v821
    %p824 = scmp.eq.s32.totalorder %s255, 4
    %s825 = scalar_select %p824, 1, 0
    %v826 = vstv %s825
    %vm827 = vcmp.eq.s32.totalorder %v826, 1
    %v829 = vrot.slane %v707, 6
    %v831 = vsel %vm827, %v815, %v829
    %p832 = scmp.eq.s32.totalorder %s257, 4
    %s833 = scalar_select %p832, 1, 0
    %v834 = vstv %s833
    %vm835 = vcmp.eq.s32.totalorder %v834, 1
    %v837 = vrot.slane %v715, 6
    %v839 = vsel %vm835, %v815, %v837
    %p840 = scmp.eq.s32.totalorder %s258, 4
    %s841 = scalar_select %p840, 1, 0
    %v842 = vstv %s841
    %vm843 = vcmp.eq.s32.totalorder %v842, 1
    %v845 = vrot.slane %v723, 6
    %v847 = vsel %vm843, %v815, %v845
    %p848 = scmp.eq.s32.totalorder %s259, 4
    %s849 = scalar_select %p848, 1, 0
    %v850 = vstv %s849
    %vm851 = vcmp.eq.s32.totalorder %v850, 1
    %v853 = vrot.slane %v731, 6
    %v855 = vsel %vm851, %v815, %v853
    %p856 = scmp.eq.s32.totalorder %s261, 4
    %s857 = scalar_select %p856, 1, 0
    %v858 = vstv %s857
    %vm859 = vcmp.eq.s32.totalorder %v858, 1
    %v861 = vrot.slane %v739, 6
    %v863 = vsel %vm859, %v815, %v861
    %v864 = vpack.c.bf16 %v815, %v815
    %866 = vrot.lane.b32.xlu0 %v864, 32
    %v867 = vpop.permute.xlu0 %866
    %v869 = vsel %vm203, %v867, 0
    %871 = vmatprep.subr.bf16.mxu0 0
    %872 = vmatpush1.bf16.msra.mxu0 %v252
    %873 = vmatprep.subr.bf16.mxu0 0
    %874 = vmatpush1.bf16.msra.mxu0 %v253
    %875 = vmatprep.subr.bf16.mxu0 0
    %876 = vmatpush1.bf16.msra.mxu0 0
    %877 = vmatprep.subr.bf16.mxu0 0
    %878 = vmatpush1.bf16.msra.mxu0 0
    %879 = vmatprep.subr.bf16.mxu0 0
    %880 = vmatpush1.bf16.msra.mxu0 0
    %881 = vmatprep.subr.bf16.mxu0 0
    %882 = vmatpush1.bf16.msra.mxu0 0
    %883 = vmatprep.subr.bf16.mxu0 0
    %884 = vmatpush1.bf16.msra.mxu0 0
    %885 = vmatprep.subr.bf16.mxu0 0
    %886 = vmatpush1.bf16.msra.mxu0 0
    %887 = vmatprep.subr.bf16.mxu0 0
    %888 = vmatpush1.bf16.msra.mxu0 0
    %889 = vmatprep.subr.bf16.mxu0 0
    %890 = vmatpush1.bf16.msra.mxu0 0
    %891 = vmatprep.subr.bf16.mxu0 0
    %892 = vmatpush1.bf16.msra.mxu0 0
    %893 = vmatprep.subr.bf16.mxu0 0
    %894 = vmatpush1.bf16.msra.mxu0 0
    %895 = vmatprep.subr.bf16.mxu0 0
    %896 = vmatpush1.bf16.msra.mxu0 0
    %897 = vmatprep.subr.bf16.mxu0 0
    %898 = vmatpush1.bf16.msra.mxu0 0
    %899 = vmatprep.subr.bf16.mxu0 0
    %900 = vmatpush1.bf16.msra.mxu0 0
    %901 = vmatprep.subr.bf16.mxu0 0
    %902 = vmatpush1.bf16.msra.mxu0 0
    %903 = vmatprep.mubr.bf16.mxu0 0
    %904 = vmatmul.mubr.bf16.gmra.mrb[0].mxu0 %v869
    %v905 = vpop.f32.mrb[0].mxu0
    %v906 = vadd.f32 0.0, %v905
    %v907 = vpop.f32.mrb[0].mxu0
    %v908 = vpop.f32.mrb[0].mxu0
    %v909 = vpop.f32.mrb[0].mxu0
    %910 = vdwg.mxu0
    %v912 = vrot.slane %v906, 6
    %v914 = vadd.f32 %v245, %v912
    %v915 = vxor.u32 %v914, 2147483648
    %v916 = vmul.f32 %v915, 1.442695
    %v917 = vpow.pop %v916
    %v918 = vadd.f32 %v917, 1.0
    %v919 = vrcp.pop %v918
    %v920 = vmul.f32 1.0, %v919
    %v921 = vtanh.pop %v914
    %v923 = vrot.slane %v809, 6
    %v925 = vmul.f32 %v920, %v923
    %927 = vrot.lane.b32.xlu0 %v921, 64
    %v928 = vpop.permute.xlu0 %927
    %v930 = vmul.f32 %v920, %v928
    %932 = vrot.lane.b32.xlu0 %v930, 32
    %v933 = vpop.permute.xlu0 %932
    %v935 = vadd.f32 %v925, %v933
    %v936 = vtanh.pop %v935
    %938 = vrot.lane.b32.xlu0 %v936, 64
    %v939 = vpop.permute.xlu0 %938
    %v941 = vmul.f32 %v920, %v939
    %p942 = scmp.eq.s32.totalorder %s254, 5
    %s943 = scalar_select %p942, 1, 0
    %v944 = vstv %s943
    %vm945 = vcmp.eq.s32.totalorder %v944, 1
    %v947 = vrot.slane %v823, 6
    %v949 = vsel %vm945, %v941, %v947
    %p950 = scmp.eq.s32.totalorder %s255, 5
    %s951 = scalar_select %p950, 1, 0
    %v952 = vstv %s951
    %vm953 = vcmp.eq.s32.totalorder %v952, 1
    %v955 = vrot.slane %v831, 6
    %v957 = vsel %vm953, %v941, %v955
    %p958 = scmp.eq.s32.totalorder %s257, 5
    %s959 = scalar_select %p958, 1, 0
    %v960 = vstv %s959
    %vm961 = vcmp.eq.s32.totalorder %v960, 1
    %v963 = vrot.slane %v839, 6
    %v965 = vsel %vm961, %v941, %v963
    %p966 = scmp.eq.s32.totalorder %s258, 5
    %s967 = scalar_select %p966, 1, 0
    %v968 = vstv %s967
    %vm969 = vcmp.eq.s32.totalorder %v968, 1
    %v971 = vrot.slane %v847, 6
    %v973 = vsel %vm969, %v941, %v971
    %p974 = scmp.eq.s32.totalorder %s259, 5
    %s975 = scalar_select %p974, 1, 0
    %v976 = vstv %s975
    %vm977 = vcmp.eq.s32.totalorder %v976, 1
    %v979 = vrot.slane %v855, 6
    %v981 = vsel %vm977, %v941, %v979
    %p982 = scmp.eq.s32.totalorder %s261, 5
    %s983 = scalar_select %p982, 1, 0
    %v984 = vstv %s983
    %vm985 = vcmp.eq.s32.totalorder %v984, 1
    %v987 = vrot.slane %v863, 6
    %v989 = vsel %vm985, %v941, %v987
    %v990 = vpack.c.bf16 %v941, %v941
    %v992 = vrot.slane %v990, 1
    %993 = vrot.lane.b32.xlu0 %v992, 32
    %v994 = vpop.permute.xlu0 %993
    %v996 = vsel %vm203, %v994, 0
    %998 = vmatprep.subr.bf16.mxu0 0
    %999 = vmatpush1.bf16.msra.mxu0 %v252
    %1000 = vmatprep.subr.bf16.mxu0 0
    %1001 = vmatpush1.bf16.msra.mxu0 %v253
    %1002 = vmatprep.subr.bf16.mxu0 0
    %1003 = vmatpush1.bf16.msra.mxu0 0
    %1004 = vmatprep.subr.bf16.mxu0 0
    %1005 = vmatpush1.bf16.msra.mxu0 0
    %1006 = vmatprep.subr.bf16.mxu0 0
    %1007 = vmatpush1.bf16.msra.mxu0 0
    %1008 = vmatprep.subr.bf16.mxu0 0
    %1009 = vmatpush1.bf16.msra.mxu0 0
    %1010 = vmatprep.subr.bf16.mxu0 0
    %1011 = vmatpush1.bf16.msra.mxu0 0
    %1012 = vmatprep.subr.bf16.mxu0 0
    %1013 = vmatpush1.bf16.msra.mxu0 0
    %1014 = vmatprep.subr.bf16.mxu0 0
    %1015 = vmatpush1.bf16.msra.mxu0 0
    %1016 = vmatprep.subr.bf16.mxu0 0
    %1017 = vmatpush1.bf16.msra.mxu0 0
    %1018 = vmatprep.subr.bf16.mxu0 0
    %1019 = vmatpush1.bf16.msra.mxu0 0
    %1020 = vmatprep.subr.bf16.mxu0 0
    %1021 = vmatpush1.bf16.msra.mxu0 0
    %1022 = vmatprep.subr.bf16.mxu0 0
    %1023 = vmatpush1.bf16.msra.mxu0 0
    %1024 = vmatprep.subr.bf16.mxu0 0
    %1025 = vmatpush1.bf16.msra.mxu0 0
    %1026 = vmatprep.subr.bf16.mxu0 0
    %1027 = vmatpush1.bf16.msra.mxu0 0
    %1028 = vmatprep.subr.bf16.mxu0 0
    %1029 = vmatpush1.bf16.msra.mxu0 0
    %1030 = vmatprep.mubr.bf16.mxu0 0
    %1031 = vmatmul.mubr.bf16.gmra.mrb[0].mxu0 %v996
    %v1032 = vpop.f32.mrb[0].mxu0
    %v1033 = vadd.f32 0.0, %v1032
    %v1034 = vpop.f32.mrb[0].mxu0
    %v1035 = vpop.f32.mrb[0].mxu0
    %v1036 = vpop.f32.mrb[0].mxu0
    %1037 = vdwg.mxu0
    %v1039 = vrot.slane %v1033, 4
    %v1041 = vadd.f32 %v245, %v1039
    %v1042 = vxor.u32 %v1041, 2147483648
    %v1043 = vmul.f32 %v1042, 1.442695
    %v1044 = vpow.pop %v1043
    %v1045 = vadd.f32 %v1044, 1.0
    %v1046 = vrcp.pop %v1045
    %v1047 = vmul.f32 1.0, %v1046
    %v1048 = vtanh.pop %v1041
    %v1050 = vrot.slane %v935, 6
    %v1052 = vmul.f32 %v1047, %v1050
    %1054 = vrot.lane.b32.xlu0 %v1048, 64
    %v1055 = vpop.permute.xlu0 %1054
    %v1057 = vmul.f32 %v1047, %v1055
    %1059 = vrot.lane.b32.xlu0 %v1057, 32
    %v1060 = vpop.permute.xlu0 %1059
    %v1062 = vadd.f32 %v1052, %v1060
    %v1063 = vtanh.pop %v1062
    %1065 = vrot.lane.b32.xlu0 %v1063, 64
    %v1066 = vpop.permute.xlu0 %1065
    %v1068 = vmul.f32 %v1047, %v1066
    %p1069 = scmp.eq.s32.totalorder %s254, 6
    %s1070 = scalar_select %p1069, 1, 0
    %v1071 = vstv %s1070
    %vm1072 = vcmp.eq.s32.totalorder %v1071, 1
    %v1074 = vrot.slane %v949, 6
    %v1076 = vsel %vm1072, %v1068, %v1074
    %p1077 = scmp.eq.s32.totalorder %s255, 6
    %s1078 = scalar_select %p1077, 1, 0
    %v1079 = vstv %s1078
    %vm1080 = vcmp.eq.s32.totalorder %v1079, 1
    %v1082 = vrot.slane %v957, 6
    %v1084 = vsel %vm1080, %v1068, %v1082
    %p1085 = scmp.eq.s32.totalorder %s257, 6
    %s1086 = scalar_select %p1085, 1, 0
    %v1087 = vstv %s1086
    %vm1088 = vcmp.eq.s32.totalorder %v1087, 1
    %v1090 = vrot.slane %v965, 6
    %v1092 = vsel %vm1088, %v1068, %v1090
    %p1093 = scmp.eq.s32.totalorder %s258, 6
    %s1094 = scalar_select %p1093, 1, 0
    %v1095 = vstv %s1094
    %vm1096 = vcmp.eq.s32.totalorder %v1095, 1
    %v1098 = vrot.slane %v973, 6
    %v1100 = vsel %vm1096, %v1068, %v1098
    %p1101 = scmp.eq.s32.totalorder %s259, 6
    %s1102 = scalar_select %p1101, 1, 0
    %v1103 = vstv %s1102
    %vm1104 = vcmp.eq.s32.totalorder %v1103, 1
    %v1106 = vrot.slane %v981, 6
    %v1108 = vsel %vm1104, %v1068, %v1106
    %p1109 = scmp.eq.s32.totalorder %s261, 6
    %s1110 = scalar_select %p1109, 1, 0
    %v1111 = vstv %s1110
    %vm1112 = vcmp.eq.s32.totalorder %v1111, 1
    %v1114 = vrot.slane %v989, 6
    %v1116 = vsel %vm1112, %v1068, %v1114
    %v1117 = vpack.c.bf16 %v1068, %v1068
    %v1119 = vrot.slane %v1117, 2
    %1120 = vrot.lane.b32.xlu0 %v1119, 32
    %v1121 = vpop.permute.xlu0 %1120
    %v1123 = vsel %vm203, %v1121, 0
    %1125 = vmatprep.subr.bf16.mxu0 0
    %1126 = vmatpush1.bf16.msra.mxu0 %v252
    %1127 = vmatprep.subr.bf16.mxu0 0
    %1128 = vmatpush1.bf16.msra.mxu0 %v253
    %1129 = vmatprep.subr.bf16.mxu0 0
    %1130 = vmatpush1.bf16.msra.mxu0 0
    %1131 = vmatprep.subr.bf16.mxu0 0
    %1132 = vmatpush1.bf16.msra.mxu0 0
    %1133 = vmatprep.subr.bf16.mxu0 0
    %1134 = vmatpush1.bf16.msra.mxu0 0
    %1135 = vmatprep.subr.bf16.mxu0 0
    %1136 = vmatpush1.bf16.msra.mxu0 0
    %1137 = vmatprep.subr.bf16.mxu0 0
    %1138 = vmatpush1.bf16.msra.mxu0 0
    %1139 = vmatprep.subr.bf16.mxu0 0
    %1140 = vmatpush1.bf16.msra.mxu0 0
    %1141 = vmatprep.subr.bf16.mxu0 0
    %1142 = vmatpush1.bf16.msra.mxu0 0
    %1143 = vmatprep.subr.bf16.mxu0 0
    %1144 = vmatpush1.bf16.msra.mxu0 0
    %1145 = vmatprep.subr.bf16.mxu0 0
    %1146 = vmatpush1.bf16.msra.mxu0 0
    %1147 = vmatprep.subr.bf16.mxu0 0
    %1148 = vmatpush1.bf16.msra.mxu0 0
    %1149 = vmatprep.subr.bf16.mxu0 0
    %1150 = vmatpush1.bf16.msra.mxu0 0
    %1151 = vmatprep.subr.bf16.mxu0 0
    %1152 = vmatpush1.bf16.msra.mxu0 0
    %1153 = vmatprep.subr.bf16.mxu0 0
    %1154 = vmatpush1.bf16.msra.mxu0 0
    %1155 = vmatprep.subr.bf16.mxu0 0
    %1156 = vmatpush1.bf16.msra.mxu0 0
    %1157 = vmatprep.mubr.bf16.mxu0 0
    %1158 = vmatmul.mubr.bf16.gmra.mrb[0].mxu0 %v1123
    %v1159 = vpop.f32.mrb[0].mxu0
    %v1160 = vadd.f32 0.0, %v1159
    %v1161 = vpop.f32.mrb[0].mxu0
    %v1162 = vpop.f32.mrb[0].mxu0
    %v1163 = vpop.f32.mrb[0].mxu0
    %1164 = vdwg.mxu0
    %v1166 = vrot.slane %v1160, 2
    %v1168 = vadd.f32 %v245, %v1166
    %v1169 = vxor.u32 %v1168, 2147483648
    %v1170 = vmul.f32 %v1169, 1.442695
    %v1171 = vpow.pop %v1170
    %v1172 = vadd.f32 %v1171, 1.0
    %v1173 = vrcp.pop %v1172
    %v1174 = vmul.f32 1.0, %v1173
    %v1175 = vtanh.pop %v1168
    %v1177 = vrot.slane %v1062, 6
    %v1179 = vmul.f32 %v1174, %v1177
    %1181 = vrot.lane.b32.xlu0 %v1175, 64
    %v1182 = vpop.permute.xlu0 %1181
    %v1184 = vmul.f32 %v1174, %v1182
    %1186 = vrot.lane.b32.xlu0 %v1184, 32
    %v1187 = vpop.permute.xlu0 %1186
    %v1189 = vadd.f32 %v1179, %v1187
    %v1190 = vtanh.pop %v1189
    %1192 = vrot.lane.b32.xlu0 %v1190, 64
    %v1193 = vpop.permute.xlu0 %1192
    %v1195 = vmul.f32 %v1174, %v1193
    %p1196 = scmp.eq.s32.totalorder %s254, 7
    %s1197 = scalar_select %p1196, 1, 0
    %v1198 = vstv %s1197
    %vm1199 = vcmp.eq.s32.totalorder %v1198, 1
    %v1201 = vrot.slane %v1076, 6
    %v1203 = vsel %vm1199, %v1195, %v1201
    %p1204 = scmp.eq.s32.totalorder %s255, 7
    %s1205 = scalar_select %p1204, 1, 0
    %v1206 = vstv %s1205
    %vm1207 = vcmp.eq.s32.totalorder %v1206, 1
    %v1209 = vrot.slane %v1084, 6
    %v1211 = vsel %vm1207, %v1195, %v1209
    %p1212 = scmp.eq.s32.totalorder %s257, 7
    %s1213 = scalar_select %p1212, 1, 0
    %v1214 = vstv %s1213
    %vm1215 = vcmp.eq.s32.totalorder %v1214, 1
    %v1217 = vrot.slane %v1092, 6
    %v1219 = vsel %vm1215, %v1195, %v1217
    %p1220 = scmp.eq.s32.totalorder %s258, 7
    %s1221 = scalar_select %p1220, 1, 0
    %v1222 = vstv %s1221
    %vm1223 = vcmp.eq.s32.totalorder %v1222, 1
    %v1225 = vrot.slane %v1100, 6
    %v1227 = vsel %vm1223, %v1195, %v1225
    %p1228 = scmp.eq.s32.totalorder %s259, 7
    %s1229 = scalar_select %p1228, 1, 0
    %v1230 = vstv %s1229
    %vm1231 = vcmp.eq.s32.totalorder %v1230, 1
    %v1233 = vrot.slane %v1108, 6
    %v1235 = vsel %vm1231, %v1195, %v1233
    %p1236 = scmp.eq.s32.totalorder %s261, 7
    %s1237 = scalar_select %p1236, 1, 0
    %v1238 = vstv %s1237
    %vm1239 = vcmp.eq.s32.totalorder %v1238, 1
    %v1241 = vrot.slane %v1116, 6
    %v1243 = vsel %vm1239, %v1195, %v1241
    %v1244 = vld [vmem:[%s8] sm:$0x1]
    %v1246 = vrot.slane %v1203, 6
    %v1249 = vrot.slane %v1227, 6
    %v1251 = vsel %vm108, %v1246, %v1249
    %v1252 = vld [vmem:[%s7] sm:$0xff]
    %v1253 = vld [vmem:[%s7 + $0x8] sm:$0xff]
    %v1254 = vld [vmem:[%s7 + $0x10] sm:$0xff]
    %v1255 = vld [vmem:[%s7 + $0x18] sm:$0xff]
    %1257 = vrot.lane.b32.xlu0 %v1251, 32
    %v1258 = vpop.permute.xlu0 %1257
    %v1259 = vsel %vm203, %v1258, 0
    %1261 = vmatprep.subr.mxu0 0.0
    %1262 = vmatpush1.msra.mxu0 %v1252
    %1263 = vmatprep.subr.mxu0 0.0
    %1264 = vmatpush1.msra.mxu0 %v1253
    %1265 = vmatprep.subr.mxu0 0.0
    %1266 = vmatpush1.msra.mxu0 %v1254
    %1267 = vmatprep.subr.mxu0 0.0
    %1268 = vmatpush1.msra.mxu0 %v1255
    %1269 = vmatprep.subr.mxu0 0.0
    %1270 = vmatpush1.msra.mxu0 0.0
    %1271 = vmatprep.subr.mxu0 0.0
    %1272 = vmatpush1.msra.mxu0 0.0
    %1273 = vmatprep.subr.mxu0 0.0
    %1274 = vmatpush1.msra.mxu0 0.0
    %1275 = vmatprep.subr.mxu0 0.0
    %1276 = vmatpush1.msra.mxu0 0.0
    %1277 = vmatprep.subr.mxu0 0.0
    %1278 = vmatpush1.msra.mxu0 0.0
    %1279 = vmatprep.subr.mxu0 0.0
    %1280 = vmatpush1.msra.mxu0 0.0
    %1281 = vmatprep.subr.mxu0 0.0
    %1282 = vmatpush1.msra.mxu0 0.0
    %1283 = vmatprep.subr.mxu0 0.0
    %1284 = vmatpush1.msra.mxu0 0.0
    %1285 = vmatprep.subr.mxu0 0.0
    %1286 = vmatpush1.msra.mxu0 0.0
    %1287 = vmatprep.subr.mxu0 0.0
    %1288 = vmatpush1.msra.mxu0 0.0
    %1289 = vmatprep.subr.mxu0 0.0
    %1290 = vmatpush1.msra.mxu0 0.0
    %1291 = vmatprep.subr.mxu0 0.0
    %1292 = vmatpush1.msra.mxu0 0.0
    %1293 = vmatprep.subr.mxu0 0.0
    %1294 = vmatpush1.msra.mxu0 0.0
    %1295 = vmatprep.subr.mxu0 0.0
    %1296 = vmatpush1.msra.mxu0 0.0
    %1297 = vmatprep.subr.mxu0 0.0
    %1298 = vmatpush1.msra.mxu0 0.0
    %1299 = vmatprep.subr.mxu0 0.0
    %1300 = vmatpush1.msra.mxu0 0.0
    %1301 = vmatprep.subr.mxu0 0.0
    %1302 = vmatpush1.msra.mxu0 0.0
    %1303 = vmatprep.subr.mxu0 0.0
    %1304 = vmatpush1.msra.mxu0 0.0
    %1305 = vmatprep.subr.mxu0 0.0
    %1306 = vmatpush1.msra.mxu0 0.0
    %1307 = vmatprep.subr.mxu0 0.0
    %1308 = vmatpush1.msra.mxu0 0.0
    %1309 = vmatprep.subr.mxu0 0.0
    %1310 = vmatpush1.msra.mxu0 0.0
    %1311 = vmatprep.subr.mxu0 0.0
    %1312 = vmatpush1.msra.mxu0 0.0
    %1313 = vmatprep.subr.mxu0 0.0
    %1314 = vmatpush1.msra.mxu0 0.0
    %1315 = vmatprep.subr.mxu0 0.0
    %1316 = vmatpush1.msra.mxu0 0.0
    %1317 = vmatprep.subr.mxu0 0.0
    %1318 = vmatpush1.msra.mxu0 0.0
    %1319 = vmatprep.subr.mxu0 0.0
    %1320 = vmatpush1.msra.mxu0 0.0
    %1321 = vmatprep.subr.mxu0 0.0
    %1322 = vmatpush1.msra.mxu0 0.0
    %1323 = vmatprep.subr.mxu0 0.0
    %1324 = vmatpush1.msra.mxu0 0.0
    %1325 = vmatprep.mubr.f32.mxu0 0.0
    %1326 = vmatmul.mubr.f32.gmra.mrb[0].mxu0 %v1259
    %v1327 = vpop.f32.mrb[0].mxu0
    %v1328 = vadd.f32 0.0, %v1327
    %v1329 = vpop.f32.mrb[0].mxu0
    %1330 = vdwg.mxu0
    %v1332 = vlaneseq
    %v1333 = vshrl.u32 %v1332, 7
    %v1334 = vsub.s32 0, %v1333
    %v1335 = vrot.slane %v1244, %v1334
    %v1337 = vadd.f32 %v1335, %v1328
    %v1339 = vrot.slane %v1211, 6
    %v1342 = vrot.slane %v1235, 6
    %v1344 = vsel %vm108, %v1339, %v1342
    %v1345 = vld [vmem:[%s7 + $0x20] sm:$0xff]
    %v1346 = vld [vmem:[%s7 + $0x28] sm:$0xff]
    %v1347 = vld [vmem:[%s7 + $0x30] sm:$0xff]
    %v1348 = vld [vmem:[%s7 + $0x38] sm:$0xff]
    %1350 = vrot.lane.b32.xlu0 %v1344, 32
    %v1351 = vpop.permute.xlu0 %1350
    %v1352 = vsel %vm203, %v1351, 0
    %1354 = vmatprep.subr.mxu0 0.0
    %1355 = vmatpush1.msra.mxu0 %v1345
    %1356 = vmatprep.subr.mxu0 0.0
    %1357 = vmatpush1.msra.mxu0 %v1346
    %1358 = vmatprep.subr.mxu0 0.0
    %1359 = vmatpush1.msra.mxu0 %v1347
    %1360 = vmatprep.subr.mxu0 0.0
    %1361 = vmatpush1.msra.mxu0 %v1348
    %1362 = vmatprep.subr.mxu0 0.0
    %1363 = vmatpush1.msra.mxu0 0.0
    %1364 = vmatprep.subr.mxu0 0.0
    %1365 = vmatpush1.msra.mxu0 0.0
    %1366 = vmatprep.subr.mxu0 0.0
    %1367 = vmatpush1.msra.mxu0 0.0
    %1368 = vmatprep.subr.mxu0 0.0
    %1369 = vmatpush1.msra.mxu0 0.0
    %1370 = vmatprep.subr.mxu0 0.0
    %1371 = vmatpush1.msra.mxu0 0.0
    %1372 = vmatprep.subr.mxu0 0.0
    %1373 = vmatpush1.msra.mxu0 0.0
    %1374 = vmatprep.subr.mxu0 0.0
    %1375 = vmatpush1.msra.mxu0 0.0
    %1376 = vmatprep.subr.mxu0 0.0
    %1377 = vmatpush1.msra.mxu0 0.0
    %1378 = vmatprep.subr.mxu0 0.0
    %1379 = vmatpush1.msra.mxu0 0.0
    %1380 = vmatprep.subr.mxu0 0.0
    %1381 = vmatpush1.msra.mxu0 0.0
    %1382 = vmatprep.subr.mxu0 0.0
    %1383 = vmatpush1.msra.mxu0 0.0
    %1384 = vmatprep.subr.mxu0 0.0
    %1385 = vmatpush1.msra.mxu0 0.0
    %1386 = vmatprep.subr.mxu0 0.0
    %1387 = vmatpush1.msra.mxu0 0.0
    %1388 = vmatprep.subr.mxu0 0.0
    %1389 = vmatpush1.msra.mxu0 0.0
    %1390 = vmatprep.subr.mxu0 0.0
    %1391 = vmatpush1.msra.mxu0 0.0
    %1392 = vmatprep.subr.mxu0 0.0
    %1393 = vmatpush1.msra.mxu0 0.0
    %1394 = vmatprep.subr.mxu0 0.0
    %1395 = vmatpush1.msra.mxu0 0.0
    %1396 = vmatprep.subr.mxu0 0.0
    %1397 = vmatpush1.msra.mxu0 0.0
    %1398 = vmatprep.subr.mxu0 0.0
    %1399 = vmatpush1.msra.mxu0 0.0
    %1400 = vmatprep.subr.mxu0 0.0
    %1401 = vmatpush1.msra.mxu0 0.0
    %1402 = vmatprep.subr.mxu0 0.0
    %1403 = vmatpush1.msra.mxu0 0.0
    %1404 = vmatprep.subr.mxu0 0.0
    %1405 = vmatpush1.msra.mxu0 0.0
    %1406 = vmatprep.subr.mxu0 0.0
    %1407 = vmatpush1.msra.mxu0 0.0
    %1408 = vmatprep.subr.mxu0 0.0
    %1409 = vmatpush1.msra.mxu0 0.0
    %1410 = vmatprep.subr.mxu0 0.0
    %1411 = vmatpush1.msra.mxu0 0.0
    %1412 = vmatprep.subr.mxu0 0.0
    %1413 = vmatpush1.msra.mxu0 0.0
    %1414 = vmatprep.subr.mxu0 0.0
    %1415 = vmatpush1.msra.mxu0 0.0
    %1416 = vmatprep.subr.mxu0 0.0
    %1417 = vmatpush1.msra.mxu0 0.0
    %1418 = vmatprep.mubr.f32.mxu0 0.0
    %1419 = vmatmul.mubr.f32.gmra.mrb[0].mxu0 %v1352
    %v1420 = vpop.f32.mrb[0].mxu0
    %v1421 = vadd.f32 0.0, %v1420
    %v1422 = vpop.f32.mrb[0].mxu0
    %1423 = vdwg.mxu0
    %v1424 = vadd.f32 %v1337, %v1421
    %v1426 = vrot.slane %v1219, 6
    %v1429 = vrot.slane %v1243, 6
    %v1431 = vsel %vm108, %v1426, %v1429
    %v1432 = vld [vmem:[%s7 + $0x40] sm:$0xff]
    %v1433 = vld [vmem:[%s7 + $0x48] sm:$0xff]
    %v1434 = vld [vmem:[%s7 + $0x50] sm:$0xff]
    %v1435 = vld [vmem:[%s7 + $0x58] sm:$0xff]
    %1437 = vrot.lane.b32.xlu0 %v1431, 32
    %v1438 = vpop.permute.xlu0 %1437
    %v1439 = vsel %vm203, %v1438, 0
    %1441 = vmatprep.subr.mxu0 0.0
    %1442 = vmatpush1.msra.mxu0 %v1432
    %1443 = vmatprep.subr.mxu0 0.0
    %1444 = vmatpush1.msra.mxu0 %v1433
    %1445 = vmatprep.subr.mxu0 0.0
    %1446 = vmatpush1.msra.mxu0 %v1434
    %1447 = vmatprep.subr.mxu0 0.0
    %1448 = vmatpush1.msra.mxu0 %v1435
    %1449 = vmatprep.subr.mxu0 0.0
    %1450 = vmatpush1.msra.mxu0 0.0
    %1451 = vmatprep.subr.mxu0 0.0
    %1452 = vmatpush1.msra.mxu0 0.0
    %1453 = vmatprep.subr.mxu0 0.0
    %1454 = vmatpush1.msra.mxu0 0.0
    %1455 = vmatprep.subr.mxu0 0.0
    %1456 = vmatpush1.msra.mxu0 0.0
    %1457 = vmatprep.subr.mxu0 0.0
    %1458 = vmatpush1.msra.mxu0 0.0
    %1459 = vmatprep.subr.mxu0 0.0
    %1460 = vmatpush1.msra.mxu0 0.0
    %1461 = vmatprep.subr.mxu0 0.0
    %1462 = vmatpush1.msra.mxu0 0.0
    %1463 = vmatprep.subr.mxu0 0.0
    %1464 = vmatpush1.msra.mxu0 0.0
    %1465 = vmatprep.subr.mxu0 0.0
    %1466 = vmatpush1.msra.mxu0 0.0
    %1467 = vmatprep.subr.mxu0 0.0
    %1468 = vmatpush1.msra.mxu0 0.0
    %1469 = vmatprep.subr.mxu0 0.0
    %1470 = vmatpush1.msra.mxu0 0.0
    %1471 = vmatprep.subr.mxu0 0.0
    %1472 = vmatpush1.msra.mxu0 0.0
    %1473 = vmatprep.subr.mxu0 0.0
    %1474 = vmatpush1.msra.mxu0 0.0
    %1475 = vmatprep.subr.mxu0 0.0
    %1476 = vmatpush1.msra.mxu0 0.0
    %1477 = vmatprep.subr.mxu0 0.0
    %1478 = vmatpush1.msra.mxu0 0.0
    %1479 = vmatprep.subr.mxu0 0.0
    %1480 = vmatpush1.msra.mxu0 0.0
    %1481 = vmatprep.subr.mxu0 0.0
    %1482 = vmatpush1.msra.mxu0 0.0
    %1483 = vmatprep.subr.mxu0 0.0
    %1484 = vmatpush1.msra.mxu0 0.0
    %1485 = vmatprep.subr.mxu0 0.0
    %1486 = vmatpush1.msra.mxu0 0.0
    %1487 = vmatprep.subr.mxu0 0.0
    %1488 = vmatpush1.msra.mxu0 0.0
    %1489 = vmatprep.subr.mxu0 0.0
    %1490 = vmatpush1.msra.mxu0 0.0
    %1491 = vmatprep.subr.mxu0 0.0
    %1492 = vmatpush1.msra.mxu0 0.0
    %1493 = vmatprep.subr.mxu0 0.0
    %1494 = vmatpush1.msra.mxu0 0.0
    %1495 = vmatprep.subr.mxu0 0.0
    %1496 = vmatpush1.msra.mxu0 0.0
    %1497 = vmatprep.subr.mxu0 0.0
    %1498 = vmatpush1.msra.mxu0 0.0
    %1499 = vmatprep.subr.mxu0 0.0
    %1500 = vmatpush1.msra.mxu0 0.0
    %1501 = vmatprep.subr.mxu0 0.0
    %1502 = vmatpush1.msra.mxu0 0.0
    %1503 = vmatprep.subr.mxu0 0.0
    %1504 = vmatpush1.msra.mxu0 0.0
    %1505 = vmatprep.mubr.f32.mxu0 0.0
    %1506 = vmatmul.mubr.f32.gmra.mrb[0].mxu0 %v1439
    %v1507 = vpop.f32.mrb[0].mxu0
    %v1508 = vadd.f32 0.0, %v1507
    %v1509 = vpop.f32.mrb[0].mxu0
    %1510 = vdwg.mxu0
    %v1511 = vadd.f32 %v1424, %v1508
    %vm1512 = vcmask 9216
    %1513 = vst.msk [vmem:[#allocation6] sm:$0x3] %vm1512, %v1511
    // Predicated region
    $region26: #{tpu_custom_call.1} parent=1 // pred_check
      _
    $region27: #{tpu_custom_call.1} parent=1 // pred_check_branch
      %1515 = sbr.rel (0) target = $region29
    $region28: #{tpu_custom_call.1} parent=1 // pred_region
      %s1517 = ssub.s32 32, 32
      %1518 = vsyncadd [#allocation7], %s1517
      %s1520 = sshll.u32 [#allocation6], 4
      %s1521 = int_to_ptr.vmem [resolvable:$true] %s1520
      %1523 = dma.vmem_to_hbm [thread:$0]  %s1521, 32, %s9, [#allocation7]
    $region29: #{tpu_custom_call.1} parent=1 // pred_fallthru
      _
    // Predicated region
    $region30: #{tpu_custom_call.1} parent=1 // pred_check
      _
    $region31: #{tpu_custom_call.1} parent=1 // pred_check_branch
      %1525 = sbr.rel (0) target = $region33
    $region32: #{tpu_custom_call.1} parent=1 // pred_region
      %1526 = dma.done [#allocation7], 32
    $region33: #{tpu_custom_call.1} parent=1 // pred_fallthru
      _
    %1527 = vsyncpa [#allocation7], 1

</llo_original>
